<compile_context>
chip_gen: v6e
topology: v6e:2x2x1
jax: 0.10.0
libtpu: 0.0.40
codegen_flags: <defaults>
</compile_context>

<pallas_src>
import jax
import jax.numpy as jnp
from jax.experimental import pallas as pl
from jax.experimental.pallas import tpu as pltpu


def _pa_kernel(w_ref, taps_ref, x_ref, y_ref, p_ref, o_ref):
    # w_ref    : (1, 1)              SMEM scalar blend weight
    # taps_ref : (C, 99)             SMEM: [0:49] blend taps, [49:98] pattn taps, [98] bias
    # x/y/p    : (1, 1, 1, TH+6, Wp) VMEM reflect-padded windows (W on lanes)
    # o_ref    : (1, 1, 1, TH, W)    output tile
    TH = o_ref.shape[3]
    W = o_ref.shape[4]
    c = pl.program_id(1)                                  # channel this step handles

    w = w_ref[0, 0]
    xv = x_ref[0, 0, 0].astype(jnp.float32)               # (TH+6, Wp)
    yv = y_ref[0, 0, 0].astype(jnp.float32)
    blend = xv * w + yv * (1.0 - w)
    patt = p_ref[0, 0, 0].astype(jnp.float32)

    bias = taps_ref[c, 98]
    acc_b = jnp.full((TH, W), bias, dtype=jnp.float32)    # bias folded into init
    acc_p = jnp.zeros((TH, W), dtype=jnp.float32)         # second independent chain

    # 49-tap shift-and-accumulate, fully unrolled so the LLO scheduler can pack
    # the 4 VALU slots.  The lane-dim (kw) slice is hoisted out of the kh loop:
    # only 7 lane-shifted copies per plane, inner slices are sublane-only.
    for kw in range(7):
        bcol = blend[:, kw:kw + W]                        # (TH+6, W)
        pcol = patt[:, kw:kw + W]
        for kh in range(7):
            acc_b = acc_b + bcol[kh:kh + TH, :] * taps_ref[c, kh * 7 + kw]
            acc_p = acc_p + pcol[kh:kh + TH, :] * taps_ref[c, 49 + kh * 7 + kw]

    acc = acc_b + acc_p
    acc = jnp.maximum(acc, -60.0)                         # keep exp(-acc) finite
    denom = 1.0 + jnp.exp(-acc)                           # exp on the EUP slot
    r = pl.reciprocal(denom, approx=True)                 # EUP, keeps VALU free
    r = r * (2.0 - denom * r)                             # one Newton step -> ~f32 accurate
    o_ref[0, 0, 0] = r.astype(o_ref.dtype)


def _pick_h_tile(H, Wp, in_bytes, budget=8 << 20):
    """Largest divisor of H whose halo'd window keeps per-step VMEM small."""
    # ~ 3 double-buffered input windows + f32 blend/pattn temps + shifted copies
    #   + accumulators + output  ~= (6*in_bytes + 40) bytes per padded element.
    per_row = Wp * (6 * in_bytes + 40)
    for th in range(H, 0, -1):
        if H % th == 0 and (th + 6) * per_row <= budget:
            return th
    return 1


def pixel_attention_cga(x, y, pattn1, weight, conv_w, conv_b, *, h_block=None):
    """x, y, pattn1: (B, C, H, W); weight: (1,); conv_w: (C, 2, 7, 7); conv_b: (C,).

    Returns (B, C, H, W), matching PixelAttention_CGA.forward.
    """
    B, C, H, W = x.shape
    out_dtype = x.dtype
    Hp, Wp = H + 6, W + 6

    # Reflect padding (matches padding_mode='reflect', padding=3).
    def pad(a):
        return jnp.pad(a, ((0, 0), (0, 0), (3, 3), (3, 3)), mode="reflect")

    xp, yp, pp = pad(x), pad(y), pad(pattn1)

    th = _pick_h_tile(H, Wp, x.dtype.itemsize) if h_block is None else h_block
    assert H % th == 0, "h_block must divide H"
    nt = H // th
    thp = th + 6

    if nt == 1:
        def win(a):                                        # (B, C, 1, Hp, Wp)
            return a[:, :, None, :, :]
    else:
        # Overlapping halo windows taken from the already reflect-padded array.
        def win(a):
            return jnp.stack([a[:, :, t * th:t * th + thp, :] for t in range(nt)],
                             axis=2)                       # (B, C, nt, th+6, Wp)

    xw, yw, pw = win(xp), win(yp), win(pp)

    # Per-channel taps packed for SMEM scalar reads:
    #   [:49] = taps applied to the blended plane, [49:98] = pattn1 taps, [98] = bias.
    taps = jnp.concatenate(
        [conv_w[:, 0].reshape(C, 49),
         conv_w[:, 1].reshape(C, 49),
         conv_b.reshape(C, 1)], axis=1).astype(jnp.float32)        # (C, 99)
    w_s = weight.reshape(1, 1).astype(jnp.float32)

    out = pl.pallas_call(
        _pa_kernel,
        out_shape=jax.ShapeDtypeStruct((B, C, nt, th, W), out_dtype),
        grid=(B, C, nt),
        in_specs=[
            pl.BlockSpec((1, 1), lambda b, c, t: (0, 0),
                         memory_space=pltpu.MemorySpace.SMEM),
            pl.BlockSpec((C, 99), lambda b, c, t: (0, 0),
                         memory_space=pltpu.MemorySpace.SMEM),
            pl.BlockSpec((1, 1, 1, thp, Wp), lambda b, c, t: (b, c, t, 0, 0)),
            pl.BlockSpec((1, 1, 1, thp, Wp), lambda b, c, t: (b, c, t, 0, 0)),
            pl.BlockSpec((1, 1, 1, thp, Wp), lambda b, c, t: (b, c, t, 0, 0)),
        ],
        out_specs=pl.BlockSpec((1, 1, 1, th, W), lambda b, c, t: (b, c, t, 0, 0)),
        compiler_params=pltpu.CompilerParams(
            dimension_semantics=("parallel", "parallel", "parallel")),
    )(w_s, taps, xw, yw, pw)

    return out.reshape(B, C, H, W)                         # contiguous; no transpose


def _reference(x, y, pattn1, weight, conv_w, conv_b):
    """Pure-JAX reference matching the PyTorch forward."""
    B, C, H, W = x.shape
    w = weight[0]
    blend = x * w + y * (1.0 - w)
    combined = jnp.stack([blend, pattn1], axis=2)          # (B, C, 2, H, W)
    x2 = combined.reshape(B, 2 * C, H, W)                  # 'b c t h w -> b (c t) h w'
    x2 = jnp.pad(x2, ((0, 0), (0, 0), (3, 3), (3, 3)), mode="reflect")
    out = jax.lax.conv_general_dilated(
        x2, conv_w, window_strides=(1, 1), padding="VALID",
        dimension_numbers=("NCHW", "OIHW", "NCHW"),
        feature_group_count=C,
        precision=jax.lax.Precision.HIGHEST)
    out = out + conv_b[None, :, None, None]
    return jax.nn.sigmoid(out)


if __name__ == "__main__":
    B, C, H, W = 2, 4, 16, 16
    key = jax.random.PRNGKey(0)
    kx, ky, kp, kcw, kcb = jax.random.split(key, 5)

    x = jax.random.normal(kx, (B, C, H, W), dtype=jnp.float32)
    y = jax.random.normal(ky, (B, C, H, W), dtype=jnp.float32)
    pattn1 = jax.random.normal(kp, (B, C, H, W), dtype=jnp.float32)

    # Module __init__ sets weight = torch.ones(1); use a non-trivial value so
    # the x/y blend path is actually exercised by the check.
    weight = jnp.full((1,), 0.75, dtype=jnp.float32)
    conv_w = jax.random.normal(kcw, (C, 2, 7, 7), dtype=jnp.float32) * 0.05
    conv_b = jax.random.normal(kcb, (C,), dtype=jnp.float32) * 0.05

    ref = _reference(x, y, pattn1, weight, conv_w, conv_b)

    # Default path (single H tile at this size).
    run = jax.jit(pixel_attention_cga)
    out = jax.block_until_ready(run(x, y, pattn1, weight, conv_w, conv_b))
    assert out.shape == (B, C, H, W)
    err = float(jnp.max(jnp.abs(out - ref)))
    # tolerance leaves headroom for the approx-reciprocal + Newton sigmoid
    assert err < 2e-4, "mismatch vs reference, max abs err = %e" % err

    # Also exercise the H-tiled (halo) path.
    run_tiled = jax.jit(lambda *a: pixel_attention_cga(*a, h_block=8))
    out2 = jax.block_until_ready(run_tiled(x, y, pattn1, weight, conv_w, conv_b))
    err2 = float(jnp.max(jnp.abs(out2 - ref)))
    assert err2 < 2e-4, "tiled path mismatch vs reference, max abs err = %e" % err2

    print("KERNEL_OK")
</pallas_src>

<mosaic_0001>
module attributes {stable_mosaic.version = 11 : i64} {
  func.func @_pa_kernel(%arg0: i32, %arg1: i32, %arg2: i32, %arg3: memref<1x1xf32, #tpu.memory_space<smem>>, %arg4: memref<4x99xf32, #tpu.memory_space<smem>>, %arg5: memref<1x1x1x22x22xf32, #tpu.memory_space<vmem>>, %arg6: memref<1x1x1x22x22xf32, #tpu.memory_space<vmem>>, %arg7: memref<1x1x1x22x22xf32, #tpu.memory_space<vmem>>, %arg8: memref<1x1x1x16x16xf32, #tpu.memory_space<vmem>>) attributes {dimension_semantics = [#tpu.dimension_semantics<parallel>, #tpu.dimension_semantics<parallel>, #tpu.dimension_semantics<parallel>], iteration_bounds = array<i64: 2, 4, 1>, scalar_prefetch = 0 : i64, scratch_operands = 0 : i64, tpu.core_type = #tpu.core_type<tc>, window_params = [{transform_indices = @transform_0, window_bounds = array<i64: 1, 1>}, {transform_indices = @transform_1, window_bounds = array<i64: 4, 99>}, {transform_indices = @transform_2, window_bounds = array<i64: 1, 1, 1, 22, 22>}, {transform_indices = @transform_3, window_bounds = array<i64: 1, 1, 1, 22, 22>}, {transform_indices = @transform_4, window_bounds = array<i64: 1, 1, 1, 22, 22>}, {transform_indices = @transform_5, window_bounds = array<i64: 1, 1, 1, 16, 16>}]} {
    %c0 = arith.constant 0 : index
    %c0_0 = arith.constant 0 : index
    %0 = memref.load %arg3[%c0, %c0_0] : memref<1x1xf32, #tpu.memory_space<smem>>
    %c0_1 = arith.constant 0 : index
    %c0_2 = arith.constant 0 : index
    %c0_3 = arith.constant 0 : index
    %c0_4 = arith.constant 0 : index
    %c0_5 = arith.constant 0 : index
    %1 = vector.load %arg5[%c0_1, %c0_2, %c0_3, %c0_4, %c0_5] : memref<1x1x1x22x22xf32, #tpu.memory_space<vmem>>, vector<1x1x1x22x22xf32>
    %2 = vector.shape_cast %1 : vector<1x1x1x22x22xf32> to vector<22x22xf32>
    %c0_6 = arith.constant 0 : index
    %c0_7 = arith.constant 0 : index
    %c0_8 = arith.constant 0 : index
    %c0_9 = arith.constant 0 : index
    %c0_10 = arith.constant 0 : index
    %3 = vector.load %arg6[%c0_6, %c0_7, %c0_8, %c0_9, %c0_10] : memref<1x1x1x22x22xf32, #tpu.memory_space<vmem>>, vector<1x1x1x22x22xf32>
    %4 = vector.shape_cast %3 : vector<1x1x1x22x22xf32> to vector<22x22xf32>
    %5 = vector.broadcast %0 : f32 to vector<22x22xf32>
    %6 = arith.mulf %2, %5 : vector<22x22xf32>
    %cst = arith.constant 1.000000e+00 : f32
    %7 = arith.subf %cst, %0 : f32
    %8 = vector.broadcast %7 : f32 to vector<22x22xf32>
    %9 = arith.mulf %4, %8 : vector<22x22xf32>
    %10 = arith.addf %6, %9 : vector<22x22xf32>
    %c0_11 = arith.constant 0 : index
    %c0_12 = arith.constant 0 : index
    %c0_13 = arith.constant 0 : index
    %c0_14 = arith.constant 0 : index
    %c0_15 = arith.constant 0 : index
    %11 = vector.load %arg7[%c0_11, %c0_12, %c0_13, %c0_14, %c0_15] : memref<1x1x1x22x22xf32, #tpu.memory_space<vmem>>, vector<1x1x1x22x22xf32>
    %12 = vector.shape_cast %11 : vector<1x1x1x22x22xf32> to vector<22x22xf32>
    %13 = arith.index_cast %arg1 : i32 to index
    %c98 = arith.constant 98 : index
    %14 = memref.load %arg4[%13, %c98] : memref<4x99xf32, #tpu.memory_space<smem>>
    %15 = vector.broadcast %14 : f32 to vector<16x16xf32>
    %cst_16 = arith.constant 0.000000e+00 : f32
    %16 = vector.broadcast %cst_16 : f32 to vector<16x16xf32>
    %17 = vector.extract_strided_slice %10 {offsets = [0, 0], sizes = [22, 16], strides = [1, 1]} : vector<22x22xf32> to vector<22x16xf32>
    %18 = vector.extract_strided_slice %12 {offsets = [0, 0], sizes = [22, 16], strides = [1, 1]} : vector<22x22xf32> to vector<22x16xf32>
    %19 = vector.extract_strided_slice %17 {offsets = [0, 0], sizes = [16, 16], strides = [1, 1]} : vector<22x16xf32> to vector<16x16xf32>
    %20 = arith.index_cast %arg1 : i32 to index
    %c0_17 = arith.constant 0 : index
    %21 = memref.load %arg4[%20, %c0_17] : memref<4x99xf32, #tpu.memory_space<smem>>
    %22 = vector.broadcast %21 : f32 to vector<16x16xf32>
    %23 = arith.mulf %19, %22 : vector<16x16xf32>
    %24 = arith.addf %15, %23 : vector<16x16xf32>
    %25 = vector.extract_strided_slice %18 {offsets = [0, 0], sizes = [16, 16], strides = [1, 1]} : vector<22x16xf32> to vector<16x16xf32>
    %26 = arith.index_cast %arg1 : i32 to index
    %c49 = arith.constant 49 : index
    %27 = memref.load %arg4[%26, %c49] : memref<4x99xf32, #tpu.memory_space<smem>>
    %28 = vector.broadcast %27 : f32 to vector<16x16xf32>
    %29 = arith.mulf %25, %28 : vector<16x16xf32>
    %30 = arith.addf %16, %29 : vector<16x16xf32>
    %31 = vector.extract_strided_slice %17 {offsets = [1, 0], sizes = [16, 16], strides = [1, 1]} : vector<22x16xf32> to vector<16x16xf32>
    %32 = arith.index_cast %arg1 : i32 to index
    %c7 = arith.constant 7 : index
    %33 = memref.load %arg4[%32, %c7] : memref<4x99xf32, #tpu.memory_space<smem>>
    %34 = vector.broadcast %33 : f32 to vector<16x16xf32>
    %35 = arith.mulf %31, %34 : vector<16x16xf32>
    %36 = arith.addf %24, %35 : vector<16x16xf32>
    %37 = vector.extract_strided_slice %18 {offsets = [1, 0], sizes = [16, 16], strides = [1, 1]} : vector<22x16xf32> to vector<16x16xf32>
    %38 = arith.index_cast %arg1 : i32 to index
    %c56 = arith.constant 56 : index
    %39 = memref.load %arg4[%38, %c56] : memref<4x99xf32, #tpu.memory_space<smem>>
    %40 = vector.broadcast %39 : f32 to vector<16x16xf32>
    %41 = arith.mulf %37, %40 : vector<16x16xf32>
    %42 = arith.addf %30, %41 : vector<16x16xf32>
    %43 = vector.extract_strided_slice %17 {offsets = [2, 0], sizes = [16, 16], strides = [1, 1]} : vector<22x16xf32> to vector<16x16xf32>
    %44 = arith.index_cast %arg1 : i32 to index
    %c14 = arith.constant 14 : index
    %45 = memref.load %arg4[%44, %c14] : memref<4x99xf32, #tpu.memory_space<smem>>
    %46 = vector.broadcast %45 : f32 to vector<16x16xf32>
    %47 = arith.mulf %43, %46 : vector<16x16xf32>
    %48 = arith.addf %36, %47 : vector<16x16xf32>
    %49 = vector.extract_strided_slice %18 {offsets = [2, 0], sizes = [16, 16], strides = [1, 1]} : vector<22x16xf32> to vector<16x16xf32>
    %50 = arith.index_cast %arg1 : i32 to index
    %c63 = arith.constant 63 : index
    %51 = memref.load %arg4[%50, %c63] : memref<4x99xf32, #tpu.memory_space<smem>>
    %52 = vector.broadcast %51 : f32 to vector<16x16xf32>
    %53 = arith.mulf %49, %52 : vector<16x16xf32>
    %54 = arith.addf %42, %53 : vector<16x16xf32>
    %55 = vector.extract_strided_slice %17 {offsets = [3, 0], sizes = [16, 16], strides = [1, 1]} : vector<22x16xf32> to vector<16x16xf32>
    %56 = arith.index_cast %arg1 : i32 to index
    %c21 = arith.constant 21 : index
    %57 = memref.load %arg4[%56, %c21] : memref<4x99xf32, #tpu.memory_space<smem>>
    %58 = vector.broadcast %57 : f32 to vector<16x16xf32>
    %59 = arith.mulf %55, %58 : vector<16x16xf32>
    %60 = arith.addf %48, %59 : vector<16x16xf32>
    %61 = vector.extract_strided_slice %18 {offsets = [3, 0], sizes = [16, 16], strides = [1, 1]} : vector<22x16xf32> to vector<16x16xf32>
    %62 = arith.index_cast %arg1 : i32 to index
    %c70 = arith.constant 70 : index
    %63 = memref.load %arg4[%62, %c70] : memref<4x99xf32, #tpu.memory_space<smem>>
    %64 = vector.broadcast %63 : f32 to vector<16x16xf32>
    %65 = arith.mulf %61, %64 : vector<16x16xf32>
    %66 = arith.addf %54, %65 : vector<16x16xf32>
    %67 = vector.extract_strided_slice %17 {offsets = [4, 0], sizes = [16, 16], strides = [1, 1]} : vector<22x16xf32> to vector<16x16xf32>
    %68 = arith.index_cast %arg1 : i32 to index
    %c28 = arith.constant 28 : index
    %69 = memref.load %arg4[%68, %c28] : memref<4x99xf32, #tpu.memory_space<smem>>
    %70 = vector.broadcast %69 : f32 to vector<16x16xf32>
    %71 = arith.mulf %67, %70 : vector<16x16xf32>
    %72 = arith.addf %60, %71 : vector<16x16xf32>
    %73 = vector.extract_strided_slice %18 {offsets = [4, 0], sizes = [16, 16], strides = [1, 1]} : vector<22x16xf32> to vector<16x16xf32>
    %74 = arith.index_cast %arg1 : i32 to index
    %c77 = arith.constant 77 : index
    %75 = memref.load %arg4[%74, %c77] : memref<4x99xf32, #tpu.memory_space<smem>>
    %76 = vector.broadcast %75 : f32 to vector<16x16xf32>
    %77 = arith.mulf %73, %76 : vector<16x16xf32>
    %78 = arith.addf %66, %77 : vector<16x16xf32>
    %79 = vector.extract_strided_slice %17 {offsets = [5, 0], sizes = [16, 16], strides = [1, 1]} : vector<22x16xf32> to vector<16x16xf32>
    %80 = arith.index_cast %arg1 : i32 to index
    %c35 = arith.constant 35 : index
    %81 = memref.load %arg4[%80, %c35] : memref<4x99xf32, #tpu.memory_space<smem>>
    %82 = vector.broadcast %81 : f32 to vector<16x16xf32>
    %83 = arith.mulf %79, %82 : vector<16x16xf32>
    %84 = arith.addf %72, %83 : vector<16x16xf32>
    %85 = vector.extract_strided_slice %18 {offsets = [5, 0], sizes = [16, 16], strides = [1, 1]} : vector<22x16xf32> to vector<16x16xf32>
    %86 = arith.index_cast %arg1 : i32 to index
    %c84 = arith.constant 84 : index
    %87 = memref.load %arg4[%86, %c84] : memref<4x99xf32, #tpu.memory_space<smem>>
    %88 = vector.broadcast %87 : f32 to vector<16x16xf32>
    %89 = arith.mulf %85, %88 : vector<16x16xf32>
    %90 = arith.addf %78, %89 : vector<16x16xf32>
    %91 = vector.extract_strided_slice %17 {offsets = [6, 0], sizes = [16, 16], strides = [1, 1]} : vector<22x16xf32> to vector<16x16xf32>
    %92 = arith.index_cast %arg1 : i32 to index
    %c42 = arith.constant 42 : index
    %93 = memref.load %arg4[%92, %c42] : memref<4x99xf32, #tpu.memory_space<smem>>
    %94 = vector.broadcast %93 : f32 to vector<16x16xf32>
    %95 = arith.mulf %91, %94 : vector<16x16xf32>
    %96 = arith.addf %84, %95 : vector<16x16xf32>
    %97 = vector.extract_strided_slice %18 {offsets = [6, 0], sizes = [16, 16], strides = [1, 1]} : vector<22x16xf32> to vector<16x16xf32>
    %98 = arith.index_cast %arg1 : i32 to index
    %c91 = arith.constant 91 : index
    %99 = memref.load %arg4[%98, %c91] : memref<4x99xf32, #tpu.memory_space<smem>>
    %100 = vector.broadcast %99 : f32 to vector<16x16xf32>
    %101 = arith.mulf %97, %100 : vector<16x16xf32>
    %102 = arith.addf %90, %101 : vector<16x16xf32>
    %103 = vector.extract_strided_slice %10 {offsets = [0, 1], sizes = [22, 16], strides = [1, 1]} : vector<22x22xf32> to vector<22x16xf32>
    %104 = vector.extract_strided_slice %12 {offsets = [0, 1], sizes = [22, 16], strides = [1, 1]} : vector<22x22xf32> to vector<22x16xf32>
    %105 = vector.extract_strided_slice %103 {offsets = [0, 0], sizes = [16, 16], strides = [1, 1]} : vector<22x16xf32> to vector<16x16xf32>
    %106 = arith.index_cast %arg1 : i32 to index
    %c1 = arith.constant 1 : index
    %107 = memref.load %arg4[%106, %c1] : memref<4x99xf32, #tpu.memory_space<smem>>
    %108 = vector.broadcast %107 : f32 to vector<16x16xf32>
    %109 = arith.mulf %105, %108 : vector<16x16xf32>
    %110 = arith.addf %96, %109 : vector<16x16xf32>
    %111 = vector.extract_strided_slice %104 {offsets = [0, 0], sizes = [16, 16], strides = [1, 1]} : vector<22x16xf32> to vector<16x16xf32>
    %112 = arith.index_cast %arg1 : i32 to index
    %c50 = arith.constant 50 : index
    %113 = memref.load %arg4[%112, %c50] : memref<4x99xf32, #tpu.memory_space<smem>>
    %114 = vector.broadcast %113 : f32 to vector<16x16xf32>
    %115 = arith.mulf %111, %114 : vector<16x16xf32>
    %116 = arith.addf %102, %115 : vector<16x16xf32>
    %117 = vector.extract_strided_slice %103 {offsets = [1, 0], sizes = [16, 16], strides = [1, 1]} : vector<22x16xf32> to vector<16x16xf32>
    %118 = arith.index_cast %arg1 : i32 to index
    %c8 = arith.constant 8 : index
    %119 = memref.load %arg4[%118, %c8] : memref<4x99xf32, #tpu.memory_space<smem>>
    %120 = vector.broadcast %119 : f32 to vector<16x16xf32>
    %121 = arith.mulf %117, %120 : vector<16x16xf32>
    %122 = arith.addf %110, %121 : vector<16x16xf32>
    %123 = vector.extract_strided_slice %104 {offsets = [1, 0], sizes = [16, 16], strides = [1, 1]} : vector<22x16xf32> to vector<16x16xf32>
    %124 = arith.index_cast %arg1 : i32 to index
    %c57 = arith.constant 57 : index
    %125 = memref.load %arg4[%124, %c57] : memref<4x99xf32, #tpu.memory_space<smem>>
    %126 = vector.broadcast %125 : f32 to vector<16x16xf32>
    %127 = arith.mulf %123, %126 : vector<16x16xf32>
    %128 = arith.addf %116, %127 : vector<16x16xf32>
    %129 = vector.extract_strided_slice %103 {offsets = [2, 0], sizes = [16, 16], strides = [1, 1]} : vector<22x16xf32> to vector<16x16xf32>
    %130 = arith.index_cast %arg1 : i32 to index
    %c15 = arith.constant 15 : index
    %131 = memref.load %arg4[%130, %c15] : memref<4x99xf32, #tpu.memory_space<smem>>
    %132 = vector.broadcast %131 : f32 to vector<16x16xf32>
    %133 = arith.mulf %129, %132 : vector<16x16xf32>
    %134 = arith.addf %122, %133 : vector<16x16xf32>
    %135 = vector.extract_strided_slice %104 {offsets = [2, 0], sizes = [16, 16], strides = [1, 1]} : vector<22x16xf32> to vector<16x16xf32>
    %136 = arith.index_cast %arg1 : i32 to index
    %c64 = arith.constant 64 : index
    %137 = memref.load %arg4[%136, %c64] : memref<4x99xf32, #tpu.memory_space<smem>>
    %138 = vector.broadcast %137 : f32 to vector<16x16xf32>
    %139 = arith.mulf %135, %138 : vector<16x16xf32>
    %140 = arith.addf %128, %139 : vector<16x16xf32>
    %141 = vector.extract_strided_slice %103 {offsets = [3, 0], sizes = [16, 16], strides = [1, 1]} : vector<22x16xf32> to vector<16x16xf32>
    %142 = arith.index_cast %arg1 : i32 to index
    %c22 = arith.constant 22 : index
    %143 = memref.load %arg4[%142, %c22] : memref<4x99xf32, #tpu.memory_space<smem>>
    %144 = vector.broadcast %143 : f32 to vector<16x16xf32>
    %145 = arith.mulf %141, %144 : vector<16x16xf32>
    %146 = arith.addf %134, %145 : vector<16x16xf32>
    %147 = vector.extract_strided_slice %104 {offsets = [3, 0], sizes = [16, 16], strides = [1, 1]} : vector<22x16xf32> to vector<16x16xf32>
    %148 = arith.index_cast %arg1 : i32 to index
    %c71 = arith.constant 71 : index
    %149 = memref.load %arg4[%148, %c71] : memref<4x99xf32, #tpu.memory_space<smem>>
    %150 = vector.broadcast %149 : f32 to vector<16x16xf32>
    %151 = arith.mulf %147, %150 : vector<16x16xf32>
    %152 = arith.addf %140, %151 : vector<16x16xf32>
    %153 = vector.extract_strided_slice %103 {offsets = [4, 0], sizes = [16, 16], strides = [1, 1]} : vector<22x16xf32> to vector<16x16xf32>
    %154 = arith.index_cast %arg1 : i32 to index
    %c29 = arith.constant 29 : index
    %155 = memref.load %arg4[%154, %c29] : memref<4x99xf32, #tpu.memory_space<smem>>
    %156 = vector.broadcast %155 : f32 to vector<16x16xf32>
    %157 = arith.mulf %153, %156 : vector<16x16xf32>
    %158 = arith.addf %146, %157 : vector<16x16xf32>
    %159 = vector.extract_strided_slice %104 {offsets = [4, 0], sizes = [16, 16], strides = [1, 1]} : vector<22x16xf32> to vector<16x16xf32>
    %160 = arith.index_cast %arg1 : i32 to index
    %c78 = arith.constant 78 : index
    %161 = memref.load %arg4[%160, %c78] : memref<4x99xf32, #tpu.memory_space<smem>>
    %162 = vector.broadcast %161 : f32 to vector<16x16xf32>
    %163 = arith.mulf %159, %162 : vector<16x16xf32>
    %164 = arith.addf %152, %163 : vector<16x16xf32>
    %165 = vector.extract_strided_slice %103 {offsets = [5, 0], sizes = [16, 16], strides = [1, 1]} : vector<22x16xf32> to vector<16x16xf32>
    %166 = arith.index_cast %arg1 : i32 to index
    %c36 = arith.constant 36 : index
    %167 = memref.load %arg4[%166, %c36] : memref<4x99xf32, #tpu.memory_space<smem>>
    %168 = vector.broadcast %167 : f32 to vector<16x16xf32>
    %169 = arith.mulf %165, %168 : vector<16x16xf32>
    %170 = arith.addf %158, %169 : vector<16x16xf32>
    %171 = vector.extract_strided_slice %104 {offsets = [5, 0], sizes = [16, 16], strides = [1, 1]} : vector<22x16xf32> to vector<16x16xf32>
    %172 = arith.index_cast %arg1 : i32 to index
    %c85 = arith.constant 85 : index
    %173 = memref.load %arg4[%172, %c85] : memref<4x99xf32, #tpu.memory_space<smem>>
    %174 = vector.broadcast %173 : f32 to vector<16x16xf32>
    %175 = arith.mulf %171, %174 : vector<16x16xf32>
    %176 = arith.addf %164, %175 : vector<16x16xf32>
    %177 = vector.extract_strided_slice %103 {offsets = [6, 0], sizes = [16, 16], strides = [1, 1]} : vector<22x16xf32> to vector<16x16xf32>
    %178 = arith.index_cast %arg1 : i32 to index
    %c43 = arith.constant 43 : index
    %179 = memref.load %arg4[%178, %c43] : memref<4x99xf32, #tpu.memory_space<smem>>
    %180 = vector.broadcast %179 : f32 to vector<16x16xf32>
    %181 = arith.mulf %177, %180 : vector<16x16xf32>
    %182 = arith.addf %170, %181 : vector<16x16xf32>
    %183 = vector.extract_strided_slice %104 {offsets = [6, 0], sizes = [16, 16], strides = [1, 1]} : vector<22x16xf32> to vector<16x16xf32>
    %184 = arith.index_cast %arg1 : i32 to index
    %c92 = arith.constant 92 : index
    %185 = memref.load %arg4[%184, %c92] : memref<4x99xf32, #tpu.memory_space<smem>>
    %186 = vector.broadcast %185 : f32 to vector<16x16xf32>
    %187 = arith.mulf %183, %186 : vector<16x16xf32>
    %188 = arith.addf %176, %187 : vector<16x16xf32>
    %189 = vector.extract_strided_slice %10 {offsets = [0, 2], sizes = [22, 16], strides = [1, 1]} : vector<22x22xf32> to vector<22x16xf32>
    %190 = vector.extract_strided_slice %12 {offsets = [0, 2], sizes = [22, 16], strides = [1, 1]} : vector<22x22xf32> to vector<22x16xf32>
    %191 = vector.extract_strided_slice %189 {offsets = [0, 0], sizes = [16, 16], strides = [1, 1]} : vector<22x16xf32> to vector<16x16xf32>
    %192 = arith.index_cast %arg1 : i32 to index
    %c2 = arith.constant 2 : index
    %193 = memref.load %arg4[%192, %c2] : memref<4x99xf32, #tpu.memory_space<smem>>
    %194 = vector.broadcast %193 : f32 to vector<16x16xf32>
    %195 = arith.mulf %191, %194 : vector<16x16xf32>
    %196 = arith.addf %182, %195 : vector<16x16xf32>
    %197 = vector.extract_strided_slice %190 {offsets = [0, 0], sizes = [16, 16], strides = [1, 1]} : vector<22x16xf32> to vector<16x16xf32>
    %198 = arith.index_cast %arg1 : i32 to index
    %c51 = arith.constant 51 : index
    %199 = memref.load %arg4[%198, %c51] : memref<4x99xf32, #tpu.memory_space<smem>>
    %200 = vector.broadcast %199 : f32 to vector<16x16xf32>
    %201 = arith.mulf %197, %200 : vector<16x16xf32>
    %202 = arith.addf %188, %201 : vector<16x16xf32>
    %203 = vector.extract_strided_slice %189 {offsets = [1, 0], sizes = [16, 16], strides = [1, 1]} : vector<22x16xf32> to vector<16x16xf32>
    %204 = arith.index_cast %arg1 : i32 to index
    %c9 = arith.constant 9 : index
    %205 = memref.load %arg4[%204, %c9] : memref<4x99xf32, #tpu.memory_space<smem>>
    %206 = vector.broadcast %205 : f32 to vector<16x16xf32>
    %207 = arith.mulf %203, %206 : vector<16x16xf32>
    %208 = arith.addf %196, %207 : vector<16x16xf32>
    %209 = vector.extract_strided_slice %190 {offsets = [1, 0], sizes = [16, 16], strides = [1, 1]} : vector<22x16xf32> to vector<16x16xf32>
    %210 = arith.index_cast %arg1 : i32 to index
    %c58 = arith.constant 58 : index
    %211 = memref.load %arg4[%210, %c58] : memref<4x99xf32, #tpu.memory_space<smem>>
    %212 = vector.broadcast %211 : f32 to vector<16x16xf32>
    %213 = arith.mulf %209, %212 : vector<16x16xf32>
    %214 = arith.addf %202, %213 : vector<16x16xf32>
    %215 = vector.extract_strided_slice %189 {offsets = [2, 0], sizes = [16, 16], strides = [1, 1]} : vector<22x16xf32> to vector<16x16xf32>
    %216 = arith.index_cast %arg1 : i32 to index
    %c16 = arith.constant 16 : index
    %217 = memref.load %arg4[%216, %c16] : memref<4x99xf32, #tpu.memory_space<smem>>
    %218 = vector.broadcast %217 : f32 to vector<16x16xf32>
    %219 = arith.mulf %215, %218 : vector<16x16xf32>
    %220 = arith.addf %208, %219 : vector<16x16xf32>
    %221 = vector.extract_strided_slice %190 {offsets = [2, 0], sizes = [16, 16], strides = [1, 1]} : vector<22x16xf32> to vector<16x16xf32>
    %222 = arith.index_cast %arg1 : i32 to index
    %c65 = arith.constant 65 : index
    %223 = memref.load %arg4[%222, %c65] : memref<4x99xf32, #tpu.memory_space<smem>>
    %224 = vector.broadcast %223 : f32 to vector<16x16xf32>
    %225 = arith.mulf %221, %224 : vector<16x16xf32>
    %226 = arith.addf %214, %225 : vector<16x16xf32>
    %227 = vector.extract_strided_slice %189 {offsets = [3, 0], sizes = [16, 16], strides = [1, 1]} : vector<22x16xf32> to vector<16x16xf32>
    %228 = arith.index_cast %arg1 : i32 to index
    %c23 = arith.constant 23 : index
    %229 = memref.load %arg4[%228, %c23] : memref<4x99xf32, #tpu.memory_space<smem>>
    %230 = vector.broadcast %229 : f32 to vector<16x16xf32>
    %231 = arith.mulf %227, %230 : vector<16x16xf32>
    %232 = arith.addf %220, %231 : vector<16x16xf32>
    %233 = vector.extract_strided_slice %190 {offsets = [3, 0], sizes = [16, 16], strides = [1, 1]} : vector<22x16xf32> to vector<16x16xf32>
    %234 = arith.index_cast %arg1 : i32 to index
    %c72 = arith.constant 72 : index
    %235 = memref.load %arg4[%234, %c72] : memref<4x99xf32, #tpu.memory_space<smem>>
    %236 = vector.broadcast %235 : f32 to vector<16x16xf32>
    %237 = arith.mulf %233, %236 : vector<16x16xf32>
    %238 = arith.addf %226, %237 : vector<16x16xf32>
    %239 = vector.extract_strided_slice %189 {offsets = [4, 0], sizes = [16, 16], strides = [1, 1]} : vector<22x16xf32> to vector<16x16xf32>
    %240 = arith.index_cast %arg1 : i32 to index
    %c30 = arith.constant 30 : index
    %241 = memref.load %arg4[%240, %c30] : memref<4x99xf32, #tpu.memory_space<smem>>
    %242 = vector.broadcast %241 : f32 to vector<16x16xf32>
    %243 = arith.mulf %239, %242 : vector<16x16xf32>
    %244 = arith.addf %232, %243 : vector<16x16xf32>
    %245 = vector.extract_strided_slice %190 {offsets = [4, 0], sizes = [16, 16], strides = [1, 1]} : vector<22x16xf32> to vector<16x16xf32>
    %246 = arith.index_cast %arg1 : i32 to index
    %c79 = arith.constant 79 : index
    %247 = memref.load %arg4[%246, %c79] : memref<4x99xf32, #tpu.memory_space<smem>>
    %248 = vector.broadcast %247 : f32 to vector<16x16xf32>
    %249 = arith.mulf %245, %248 : vector<16x16xf32>
    %250 = arith.addf %238, %249 : vector<16x16xf32>
    %251 = vector.extract_strided_slice %189 {offsets = [5, 0], sizes = [16, 16], strides = [1, 1]} : vector<22x16xf32> to vector<16x16xf32>
    %252 = arith.index_cast %arg1 : i32 to index
    %c37 = arith.constant 37 : index
    %253 = memref.load %arg4[%252, %c37] : memref<4x99xf32, #tpu.memory_space<smem>>
    %254 = vector.broadcast %253 : f32 to vector<16x16xf32>
    %255 = arith.mulf %251, %254 : vector<16x16xf32>
    %256 = arith.addf %244, %255 : vector<16x16xf32>
    %257 = vector.extract_strided_slice %190 {offsets = [5, 0], sizes = [16, 16], strides = [1, 1]} : vector<22x16xf32> to vector<16x16xf32>
    %258 = arith.index_cast %arg1 : i32 to index
    %c86 = arith.constant 86 : index
    %259 = memref.load %arg4[%258, %c86] : memref<4x99xf32, #tpu.memory_space<smem>>
    %260 = vector.broadcast %259 : f32 to vector<16x16xf32>
    %261 = arith.mulf %257, %260 : vector<16x16xf32>
    %262 = arith.addf %250, %261 : vector<16x16xf32>
    %263 = vector.extract_strided_slice %189 {offsets = [6, 0], sizes = [16, 16], strides = [1, 1]} : vector<22x16xf32> to vector<16x16xf32>
    %264 = arith.index_cast %arg1 : i32 to index
    %c44 = arith.constant 44 : index
    %265 = memref.load %arg4[%264, %c44] : memref<4x99xf32, #tpu.memory_space<smem>>
    %266 = vector.broadcast %265 : f32 to vector<16x16xf32>
    %267 = arith.mulf %263, %266 : vector<16x16xf32>
    %268 = arith.addf %256, %267 : vector<16x16xf32>
    %269 = vector.extract_strided_slice %190 {offsets = [6, 0], sizes = [16, 16], strides = [1, 1]} : vector<22x16xf32> to vector<16x16xf32>
    %270 = arith.index_cast %arg1 : i32 to index
    %c93 = arith.constant 93 : index
    %271 = memref.load %arg4[%270, %c93] : memref<4x99xf32, #tpu.memory_space<smem>>
    %272 = vector.broadcast %271 : f32 to vector<16x16xf32>
    %273 = arith.mulf %269, %272 : vector<16x16xf32>
    %274 = arith.addf %262, %273 : vector<16x16xf32>
    %275 = vector.extract_strided_slice %10 {offsets = [0, 3], sizes = [22, 16], strides = [1, 1]} : vector<22x22xf32> to vector<22x16xf32>
    %276 = vector.extract_strided_slice %12 {offsets = [0, 3], sizes = [22, 16], strides = [1, 1]} : vector<22x22xf32> to vector<22x16xf32>
    %277 = vector.extract_strided_slice %275 {offsets = [0, 0], sizes = [16, 16], strides = [1, 1]} : vector<22x16xf32> to vector<16x16xf32>
    %278 = arith.index_cast %arg1 : i32 to index
    %c3 = arith.constant 3 : index
    %279 = memref.load %arg4[%278, %c3] : memref<4x99xf32, #tpu.memory_space<smem>>
    %280 = vector.broadcast %279 : f32 to vector<16x16xf32>
    %281 = arith.mulf %277, %280 : vector<16x16xf32>
    %282 = arith.addf %268, %281 : vector<16x16xf32>
    %283 = vector.extract_strided_slice %276 {offsets = [0, 0], sizes = [16, 16], strides = [1, 1]} : vector<22x16xf32> to vector<16x16xf32>
    %284 = arith.index_cast %arg1 : i32 to index
    %c52 = arith.constant 52 : index
    %285 = memref.load %arg4[%284, %c52] : memref<4x99xf32, #tpu.memory_space<smem>>
    %286 = vector.broadcast %285 : f32 to vector<16x16xf32>
    %287 = arith.mulf %283, %286 : vector<16x16xf32>
    %288 = arith.addf %274, %287 : vector<16x16xf32>
    %289 = vector.extract_strided_slice %275 {offsets = [1, 0], sizes = [16, 16], strides = [1, 1]} : vector<22x16xf32> to vector<16x16xf32>
    %290 = arith.index_cast %arg1 : i32 to index
    %c10 = arith.constant 10 : index
    %291 = memref.load %arg4[%290, %c10] : memref<4x99xf32, #tpu.memory_space<smem>>
    %292 = vector.broadcast %291 : f32 to vector<16x16xf32>
    %293 = arith.mulf %289, %292 : vector<16x16xf32>
    %294 = arith.addf %282, %293 : vector<16x16xf32>
    %295 = vector.extract_strided_slice %276 {offsets = [1, 0], sizes = [16, 16], strides = [1, 1]} : vector<22x16xf32> to vector<16x16xf32>
    %296 = arith.index_cast %arg1 : i32 to index
    %c59 = arith.constant 59 : index
    %297 = memref.load %arg4[%296, %c59] : memref<4x99xf32, #tpu.memory_space<smem>>
    %298 = vector.broadcast %297 : f32 to vector<16x16xf32>
    %299 = arith.mulf %295, %298 : vector<16x16xf32>
    %300 = arith.addf %288, %299 : vector<16x16xf32>
    %301 = vector.extract_strided_slice %275 {offsets = [2, 0], sizes = [16, 16], strides = [1, 1]} : vector<22x16xf32> to vector<16x16xf32>
    %302 = arith.index_cast %arg1 : i32 to index
    %c17 = arith.constant 17 : index
    %303 = memref.load %arg4[%302, %c17] : memref<4x99xf32, #tpu.memory_space<smem>>
    %304 = vector.broadcast %303 : f32 to vector<16x16xf32>
    %305 = arith.mulf %301, %304 : vector<16x16xf32>
    %306 = arith.addf %294, %305 : vector<16x16xf32>
    %307 = vector.extract_strided_slice %276 {offsets = [2, 0], sizes = [16, 16], strides = [1, 1]} : vector<22x16xf32> to vector<16x16xf32>
    %308 = arith.index_cast %arg1 : i32 to index
    %c66 = arith.constant 66 : index
    %309 = memref.load %arg4[%308, %c66] : memref<4x99xf32, #tpu.memory_space<smem>>
    %310 = vector.broadcast %309 : f32 to vector<16x16xf32>
    %311 = arith.mulf %307, %310 : vector<16x16xf32>
    %312 = arith.addf %300, %311 : vector<16x16xf32>
    %313 = vector.extract_strided_slice %275 {offsets = [3, 0], sizes = [16, 16], strides = [1, 1]} : vector<22x16xf32> to vector<16x16xf32>
    %314 = arith.index_cast %arg1 : i32 to index
    %c24 = arith.constant 24 : index
    %315 = memref.load %arg4[%314, %c24] : memref<4x99xf32, #tpu.memory_space<smem>>
    %316 = vector.broadcast %315 : f32 to vector<16x16xf32>
    %317 = arith.mulf %313, %316 : vector<16x16xf32>
    %318 = arith.addf %306, %317 : vector<16x16xf32>
    %319 = vector.extract_strided_slice %276 {offsets = [3, 0], sizes = [16, 16], strides = [1, 1]} : vector<22x16xf32> to vector<16x16xf32>
    %320 = arith.index_cast %arg1 : i32 to index
    %c73 = arith.constant 73 : index
    %321 = memref.load %arg4[%320, %c73] : memref<4x99xf32, #tpu.memory_space<smem>>
    %322 = vector.broadcast %321 : f32 to vector<16x16xf32>
    %323 = arith.mulf %319, %322 : vector<16x16xf32>
    %324 = arith.addf %312, %323 : vector<16x16xf32>
    %325 = vector.extract_strided_slice %275 {offsets = [4, 0], sizes = [16, 16], strides = [1, 1]} : vector<22x16xf32> to vector<16x16xf32>
    %326 = arith.index_cast %arg1 : i32 to index
    %c31 = arith.constant 31 : index
    %327 = memref.load %arg4[%326, %c31] : memref<4x99xf32, #tpu.memory_space<smem>>
    %328 = vector.broadcast %327 : f32 to vector<16x16xf32>
    %329 = arith.mulf %325, %328 : vector<16x16xf32>
    %330 = arith.addf %318, %329 : vector<16x16xf32>
    %331 = vector.extract_strided_slice %276 {offsets = [4, 0], sizes = [16, 16], strides = [1, 1]} : vector<22x16xf32> to vector<16x16xf32>
    %332 = arith.index_cast %arg1 : i32 to index
    %c80 = arith.constant 80 : index
    %333 = memref.load %arg4[%332, %c80] : memref<4x99xf32, #tpu.memory_space<smem>>
    %334 = vector.broadcast %333 : f32 to vector<16x16xf32>
    %335 = arith.mulf %331, %334 : vector<16x16xf32>
    %336 = arith.addf %324, %335 : vector<16x16xf32>
    %337 = vector.extract_strided_slice %275 {offsets = [5, 0], sizes = [16, 16], strides = [1, 1]} : vector<22x16xf32> to vector<16x16xf32>
    %338 = arith.index_cast %arg1 : i32 to index
    %c38 = arith.constant 38 : index
    %339 = memref.load %arg4[%338, %c38] : memref<4x99xf32, #tpu.memory_space<smem>>
    %340 = vector.broadcast %339 : f32 to vector<16x16xf32>
    %341 = arith.mulf %337, %340 : vector<16x16xf32>
    %342 = arith.addf %330, %341 : vector<16x16xf32>
    %343 = vector.extract_strided_slice %276 {offsets = [5, 0], sizes = [16, 16], strides = [1, 1]} : vector<22x16xf32> to vector<16x16xf32>
    %344 = arith.index_cast %arg1 : i32 to index
    %c87 = arith.constant 87 : index
    %345 = memref.load %arg4[%344, %c87] : memref<4x99xf32, #tpu.memory_space<smem>>
    %346 = vector.broadcast %345 : f32 to vector<16x16xf32>
    %347 = arith.mulf %343, %346 : vector<16x16xf32>
    %348 = arith.addf %336, %347 : vector<16x16xf32>
    %349 = vector.extract_strided_slice %275 {offsets = [6, 0], sizes = [16, 16], strides = [1, 1]} : vector<22x16xf32> to vector<16x16xf32>
    %350 = arith.index_cast %arg1 : i32 to index
    %c45 = arith.constant 45 : index
    %351 = memref.load %arg4[%350, %c45] : memref<4x99xf32, #tpu.memory_space<smem>>
    %352 = vector.broadcast %351 : f32 to vector<16x16xf32>
    %353 = arith.mulf %349, %352 : vector<16x16xf32>
    %354 = arith.addf %342, %353 : vector<16x16xf32>
    %355 = vector.extract_strided_slice %276 {offsets = [6, 0], sizes = [16, 16], strides = [1, 1]} : vector<22x16xf32> to vector<16x16xf32>
    %356 = arith.index_cast %arg1 : i32 to index
    %c94 = arith.constant 94 : index
    %357 = memref.load %arg4[%356, %c94] : memref<4x99xf32, #tpu.memory_space<smem>>
    %358 = vector.broadcast %357 : f32 to vector<16x16xf32>
    %359 = arith.mulf %355, %358 : vector<16x16xf32>
    %360 = arith.addf %348, %359 : vector<16x16xf32>
    %361 = vector.extract_strided_slice %10 {offsets = [0, 4], sizes = [22, 16], strides = [1, 1]} : vector<22x22xf32> to vector<22x16xf32>
    %362 = vector.extract_strided_slice %12 {offsets = [0, 4], sizes = [22, 16], strides = [1, 1]} : vector<22x22xf32> to vector<22x16xf32>
    %363 = vector.extract_strided_slice %361 {offsets = [0, 0], sizes = [16, 16], strides = [1, 1]} : vector<22x16xf32> to vector<16x16xf32>
    %364 = arith.index_cast %arg1 : i32 to index
    %c4 = arith.constant 4 : index
    %365 = memref.load %arg4[%364, %c4] : memref<4x99xf32, #tpu.memory_space<smem>>
    %366 = vector.broadcast %365 : f32 to vector<16x16xf32>
    %367 = arith.mulf %363, %366 : vector<16x16xf32>
    %368 = arith.addf %354, %367 : vector<16x16xf32>
    %369 = vector.extract_strided_slice %362 {offsets = [0, 0], sizes = [16, 16], strides = [1, 1]} : vector<22x16xf32> to vector<16x16xf32>
    %370 = arith.index_cast %arg1 : i32 to index
    %c53 = arith.constant 53 : index
    %371 = memref.load %arg4[%370, %c53] : memref<4x99xf32, #tpu.memory_space<smem>>
    %372 = vector.broadcast %371 : f32 to vector<16x16xf32>
    %373 = arith.mulf %369, %372 : vector<16x16xf32>
    %374 = arith.addf %360, %373 : vector<16x16xf32>
    %375 = vector.extract_strided_slice %361 {offsets = [1, 0], sizes = [16, 16], strides = [1, 1]} : vector<22x16xf32> to vector<16x16xf32>
    %376 = arith.index_cast %arg1 : i32 to index
    %c11 = arith.constant 11 : index
    %377 = memref.load %arg4[%376, %c11] : memref<4x99xf32, #tpu.memory_space<smem>>
    %378 = vector.broadcast %377 : f32 to vector<16x16xf32>
    %379 = arith.mulf %375, %378 : vector<16x16xf32>
    %380 = arith.addf %368, %379 : vector<16x16xf32>
    %381 = vector.extract_strided_slice %362 {offsets = [1, 0], sizes = [16, 16], strides = [1, 1]} : vector<22x16xf32> to vector<16x16xf32>
    %382 = arith.index_cast %arg1 : i32 to index
    %c60 = arith.constant 60 : index
    %383 = memref.load %arg4[%382, %c60] : memref<4x99xf32, #tpu.memory_space<smem>>
    %384 = vector.broadcast %383 : f32 to vector<16x16xf32>
    %385 = arith.mulf %381, %384 : vector<16x16xf32>
    %386 = arith.addf %374, %385 : vector<16x16xf32>
    %387 = vector.extract_strided_slice %361 {offsets = [2, 0], sizes = [16, 16], strides = [1, 1]} : vector<22x16xf32> to vector<16x16xf32>
    %388 = arith.index_cast %arg1 : i32 to index
    %c18 = arith.constant 18 : index
    %389 = memref.load %arg4[%388, %c18] : memref<4x99xf32, #tpu.memory_space<smem>>
    %390 = vector.broadcast %389 : f32 to vector<16x16xf32>
    %391 = arith.mulf %387, %390 : vector<16x16xf32>
    %392 = arith.addf %380, %391 : vector<16x16xf32>
    %393 = vector.extract_strided_slice %362 {offsets = [2, 0], sizes = [16, 16], strides = [1, 1]} : vector<22x16xf32> to vector<16x16xf32>
    %394 = arith.index_cast %arg1 : i32 to index
    %c67 = arith.constant 67 : index
    %395 = memref.load %arg4[%394, %c67] : memref<4x99xf32, #tpu.memory_space<smem>>
    %396 = vector.broadcast %395 : f32 to vector<16x16xf32>
    %397 = arith.mulf %393, %396 : vector<16x16xf32>
    %398 = arith.addf %386, %397 : vector<16x16xf32>
    %399 = vector.extract_strided_slice %361 {offsets = [3, 0], sizes = [16, 16], strides = [1, 1]} : vector<22x16xf32> to vector<16x16xf32>
    %400 = arith.index_cast %arg1 : i32 to index
    %c25 = arith.constant 25 : index
    %401 = memref.load %arg4[%400, %c25] : memref<4x99xf32, #tpu.memory_space<smem>>
    %402 = vector.broadcast %401 : f32 to vector<16x16xf32>
    %403 = arith.mulf %399, %402 : vector<16x16xf32>
    %404 = arith.addf %392, %403 : vector<16x16xf32>
    %405 = vector.extract_strided_slice %362 {offsets = [3, 0], sizes = [16, 16], strides = [1, 1]} : vector<22x16xf32> to vector<16x16xf32>
    %406 = arith.index_cast %arg1 : i32 to index
    %c74 = arith.constant 74 : index
    %407 = memref.load %arg4[%406, %c74] : memref<4x99xf32, #tpu.memory_space<smem>>
    %408 = vector.broadcast %407 : f32 to vector<16x16xf32>
    %409 = arith.mulf %405, %408 : vector<16x16xf32>
    %410 = arith.addf %398, %409 : vector<16x16xf32>
    %411 = vector.extract_strided_slice %361 {offsets = [4, 0], sizes = [16, 16], strides = [1, 1]} : vector<22x16xf32> to vector<16x16xf32>
    %412 = arith.index_cast %arg1 : i32 to index
    %c32 = arith.constant 32 : index
    %413 = memref.load %arg4[%412, %c32] : memref<4x99xf32, #tpu.memory_space<smem>>
    %414 = vector.broadcast %413 : f32 to vector<16x16xf32>
    %415 = arith.mulf %411, %414 : vector<16x16xf32>
    %416 = arith.addf %404, %415 : vector<16x16xf32>
    %417 = vector.extract_strided_slice %362 {offsets = [4, 0], sizes = [16, 16], strides = [1, 1]} : vector<22x16xf32> to vector<16x16xf32>
    %418 = arith.index_cast %arg1 : i32 to index
    %c81 = arith.constant 81 : index
    %419 = memref.load %arg4[%418, %c81] : memref<4x99xf32, #tpu.memory_space<smem>>
    %420 = vector.broadcast %419 : f32 to vector<16x16xf32>
    %421 = arith.mulf %417, %420 : vector<16x16xf32>
    %422 = arith.addf %410, %421 : vector<16x16xf32>
    %423 = vector.extract_strided_slice %361 {offsets = [5, 0], sizes = [16, 16], strides = [1, 1]} : vector<22x16xf32> to vector<16x16xf32>
    %424 = arith.index_cast %arg1 : i32 to index
    %c39 = arith.constant 39 : index
    %425 = memref.load %arg4[%424, %c39] : memref<4x99xf32, #tpu.memory_space<smem>>
    %426 = vector.broadcast %425 : f32 to vector<16x16xf32>
    %427 = arith.mulf %423, %426 : vector<16x16xf32>
    %428 = arith.addf %416, %427 : vector<16x16xf32>
    %429 = vector.extract_strided_slice %362 {offsets = [5, 0], sizes = [16, 16], strides = [1, 1]} : vector<22x16xf32> to vector<16x16xf32>
    %430 = arith.index_cast %arg1 : i32 to index
    %c88 = arith.constant 88 : index
    %431 = memref.load %arg4[%430, %c88] : memref<4x99xf32, #tpu.memory_space<smem>>
    %432 = vector.broadcast %431 : f32 to vector<16x16xf32>
    %433 = arith.mulf %429, %432 : vector<16x16xf32>
    %434 = arith.addf %422, %433 : vector<16x16xf32>
    %435 = vector.extract_strided_slice %361 {offsets = [6, 0], sizes = [16, 16], strides = [1, 1]} : vector<22x16xf32> to vector<16x16xf32>
    %436 = arith.index_cast %arg1 : i32 to index
    %c46 = arith.constant 46 : index
    %437 = memref.load %arg4[%436, %c46] : memref<4x99xf32, #tpu.memory_space<smem>>
    %438 = vector.broadcast %437 : f32 to vector<16x16xf32>
    %439 = arith.mulf %435, %438 : vector<16x16xf32>
    %440 = arith.addf %428, %439 : vector<16x16xf32>
    %441 = vector.extract_strided_slice %362 {offsets = [6, 0], sizes = [16, 16], strides = [1, 1]} : vector<22x16xf32> to vector<16x16xf32>
    %442 = arith.index_cast %arg1 : i32 to index
    %c95 = arith.constant 95 : index
    %443 = memref.load %arg4[%442, %c95] : memref<4x99xf32, #tpu.memory_space<smem>>
    %444 = vector.broadcast %443 : f32 to vector<16x16xf32>
    %445 = arith.mulf %441, %444 : vector<16x16xf32>
    %446 = arith.addf %434, %445 : vector<16x16xf32>
    %447 = vector.extract_strided_slice %10 {offsets = [0, 5], sizes = [22, 16], strides = [1, 1]} : vector<22x22xf32> to vector<22x16xf32>
    %448 = vector.extract_strided_slice %12 {offsets = [0, 5], sizes = [22, 16], strides = [1, 1]} : vector<22x22xf32> to vector<22x16xf32>
    %449 = vector.extract_strided_slice %447 {offsets = [0, 0], sizes = [16, 16], strides = [1, 1]} : vector<22x16xf32> to vector<16x16xf32>
    %450 = arith.index_cast %arg1 : i32 to index
    %c5 = arith.constant 5 : index
    %451 = memref.load %arg4[%450, %c5] : memref<4x99xf32, #tpu.memory_space<smem>>
    %452 = vector.broadcast %451 : f32 to vector<16x16xf32>
    %453 = arith.mulf %449, %452 : vector<16x16xf32>
    %454 = arith.addf %440, %453 : vector<16x16xf32>
    %455 = vector.extract_strided_slice %448 {offsets = [0, 0], sizes = [16, 16], strides = [1, 1]} : vector<22x16xf32> to vector<16x16xf32>
    %456 = arith.index_cast %arg1 : i32 to index
    %c54 = arith.constant 54 : index
    %457 = memref.load %arg4[%456, %c54] : memref<4x99xf32, #tpu.memory_space<smem>>
    %458 = vector.broadcast %457 : f32 to vector<16x16xf32>
    %459 = arith.mulf %455, %458 : vector<16x16xf32>
    %460 = arith.addf %446, %459 : vector<16x16xf32>
    %461 = vector.extract_strided_slice %447 {offsets = [1, 0], sizes = [16, 16], strides = [1, 1]} : vector<22x16xf32> to vector<16x16xf32>
    %462 = arith.index_cast %arg1 : i32 to index
    %c12 = arith.constant 12 : index
    %463 = memref.load %arg4[%462, %c12] : memref<4x99xf32, #tpu.memory_space<smem>>
    %464 = vector.broadcast %463 : f32 to vector<16x16xf32>
    %465 = arith.mulf %461, %464 : vector<16x16xf32>
    %466 = arith.addf %454, %465 : vector<16x16xf32>
    %467 = vector.extract_strided_slice %448 {offsets = [1, 0], sizes = [16, 16], strides = [1, 1]} : vector<22x16xf32> to vector<16x16xf32>
    %468 = arith.index_cast %arg1 : i32 to index
    %c61 = arith.constant 61 : index
    %469 = memref.load %arg4[%468, %c61] : memref<4x99xf32, #tpu.memory_space<smem>>
    %470 = vector.broadcast %469 : f32 to vector<16x16xf32>
    %471 = arith.mulf %467, %470 : vector<16x16xf32>
    %472 = arith.addf %460, %471 : vector<16x16xf32>
    %473 = vector.extract_strided_slice %447 {offsets = [2, 0], sizes = [16, 16], strides = [1, 1]} : vector<22x16xf32> to vector<16x16xf32>
    %474 = arith.index_cast %arg1 : i32 to index
    %c19 = arith.constant 19 : index
    %475 = memref.load %arg4[%474, %c19] : memref<4x99xf32, #tpu.memory_space<smem>>
    %476 = vector.broadcast %475 : f32 to vector<16x16xf32>
    %477 = arith.mulf %473, %476 : vector<16x16xf32>
    %478 = arith.addf %466, %477 : vector<16x16xf32>
    %479 = vector.extract_strided_slice %448 {offsets = [2, 0], sizes = [16, 16], strides = [1, 1]} : vector<22x16xf32> to vector<16x16xf32>
    %480 = arith.index_cast %arg1 : i32 to index
    %c68 = arith.constant 68 : index
    %481 = memref.load %arg4[%480, %c68] : memref<4x99xf32, #tpu.memory_space<smem>>
    %482 = vector.broadcast %481 : f32 to vector<16x16xf32>
    %483 = arith.mulf %479, %482 : vector<16x16xf32>
    %484 = arith.addf %472, %483 : vector<16x16xf32>
    %485 = vector.extract_strided_slice %447 {offsets = [3, 0], sizes = [16, 16], strides = [1, 1]} : vector<22x16xf32> to vector<16x16xf32>
    %486 = arith.index_cast %arg1 : i32 to index
    %c26 = arith.constant 26 : index
    %487 = memref.load %arg4[%486, %c26] : memref<4x99xf32, #tpu.memory_space<smem>>
    %488 = vector.broadcast %487 : f32 to vector<16x16xf32>
    %489 = arith.mulf %485, %488 : vector<16x16xf32>
    %490 = arith.addf %478, %489 : vector<16x16xf32>
    %491 = vector.extract_strided_slice %448 {offsets = [3, 0], sizes = [16, 16], strides = [1, 1]} : vector<22x16xf32> to vector<16x16xf32>
    %492 = arith.index_cast %arg1 : i32 to index
    %c75 = arith.constant 75 : index
    %493 = memref.load %arg4[%492, %c75] : memref<4x99xf32, #tpu.memory_space<smem>>
    %494 = vector.broadcast %493 : f32 to vector<16x16xf32>
    %495 = arith.mulf %491, %494 : vector<16x16xf32>
    %496 = arith.addf %484, %495 : vector<16x16xf32>
    %497 = vector.extract_strided_slice %447 {offsets = [4, 0], sizes = [16, 16], strides = [1, 1]} : vector<22x16xf32> to vector<16x16xf32>
    %498 = arith.index_cast %arg1 : i32 to index
    %c33 = arith.constant 33 : index
    %499 = memref.load %arg4[%498, %c33] : memref<4x99xf32, #tpu.memory_space<smem>>
    %500 = vector.broadcast %499 : f32 to vector<16x16xf32>
    %501 = arith.mulf %497, %500 : vector<16x16xf32>
    %502 = arith.addf %490, %501 : vector<16x16xf32>
    %503 = vector.extract_strided_slice %448 {offsets = [4, 0], sizes = [16, 16], strides = [1, 1]} : vector<22x16xf32> to vector<16x16xf32>
    %504 = arith.index_cast %arg1 : i32 to index
    %c82 = arith.constant 82 : index
    %505 = memref.load %arg4[%504, %c82] : memref<4x99xf32, #tpu.memory_space<smem>>
    %506 = vector.broadcast %505 : f32 to vector<16x16xf32>
    %507 = arith.mulf %503, %506 : vector<16x16xf32>
    %508 = arith.addf %496, %507 : vector<16x16xf32>
    %509 = vector.extract_strided_slice %447 {offsets = [5, 0], sizes = [16, 16], strides = [1, 1]} : vector<22x16xf32> to vector<16x16xf32>
    %510 = arith.index_cast %arg1 : i32 to index
    %c40 = arith.constant 40 : index
    %511 = memref.load %arg4[%510, %c40] : memref<4x99xf32, #tpu.memory_space<smem>>
    %512 = vector.broadcast %511 : f32 to vector<16x16xf32>
    %513 = arith.mulf %509, %512 : vector<16x16xf32>
    %514 = arith.addf %502, %513 : vector<16x16xf32>
    %515 = vector.extract_strided_slice %448 {offsets = [5, 0], sizes = [16, 16], strides = [1, 1]} : vector<22x16xf32> to vector<16x16xf32>
    %516 = arith.index_cast %arg1 : i32 to index
    %c89 = arith.constant 89 : index
    %517 = memref.load %arg4[%516, %c89] : memref<4x99xf32, #tpu.memory_space<smem>>
    %518 = vector.broadcast %517 : f32 to vector<16x16xf32>
    %519 = arith.mulf %515, %518 : vector<16x16xf32>
    %520 = arith.addf %508, %519 : vector<16x16xf32>
    %521 = vector.extract_strided_slice %447 {offsets = [6, 0], sizes = [16, 16], strides = [1, 1]} : vector<22x16xf32> to vector<16x16xf32>
    %522 = arith.index_cast %arg1 : i32 to index
    %c47 = arith.constant 47 : index
    %523 = memref.load %arg4[%522, %c47] : memref<4x99xf32, #tpu.memory_space<smem>>
    %524 = vector.broadcast %523 : f32 to vector<16x16xf32>
    %525 = arith.mulf %521, %524 : vector<16x16xf32>
    %526 = arith.addf %514, %525 : vector<16x16xf32>
    %527 = vector.extract_strided_slice %448 {offsets = [6, 0], sizes = [16, 16], strides = [1, 1]} : vector<22x16xf32> to vector<16x16xf32>
    %528 = arith.index_cast %arg1 : i32 to index
    %c96 = arith.constant 96 : index
    %529 = memref.load %arg4[%528, %c96] : memref<4x99xf32, #tpu.memory_space<smem>>
    %530 = vector.broadcast %529 : f32 to vector<16x16xf32>
    %531 = arith.mulf %527, %530 : vector<16x16xf32>
    %532 = arith.addf %520, %531 : vector<16x16xf32>
    %533 = vector.extract_strided_slice %10 {offsets = [0, 6], sizes = [22, 16], strides = [1, 1]} : vector<22x22xf32> to vector<22x16xf32>
    %534 = vector.extract_strided_slice %12 {offsets = [0, 6], sizes = [22, 16], strides = [1, 1]} : vector<22x22xf32> to vector<22x16xf32>
    %535 = vector.extract_strided_slice %533 {offsets = [0, 0], sizes = [16, 16], strides = [1, 1]} : vector<22x16xf32> to vector<16x16xf32>
    %536 = arith.index_cast %arg1 : i32 to index
    %c6 = arith.constant 6 : index
    %537 = memref.load %arg4[%536, %c6] : memref<4x99xf32, #tpu.memory_space<smem>>
    %538 = vector.broadcast %537 : f32 to vector<16x16xf32>
    %539 = arith.mulf %535, %538 : vector<16x16xf32>
    %540 = arith.addf %526, %539 : vector<16x16xf32>
    %541 = vector.extract_strided_slice %534 {offsets = [0, 0], sizes = [16, 16], strides = [1, 1]} : vector<22x16xf32> to vector<16x16xf32>
    %542 = arith.index_cast %arg1 : i32 to index
    %c55 = arith.constant 55 : index
    %543 = memref.load %arg4[%542, %c55] : memref<4x99xf32, #tpu.memory_space<smem>>
    %544 = vector.broadcast %543 : f32 to vector<16x16xf32>
    %545 = arith.mulf %541, %544 : vector<16x16xf32>
    %546 = arith.addf %532, %545 : vector<16x16xf32>
    %547 = vector.extract_strided_slice %533 {offsets = [1, 0], sizes = [16, 16], strides = [1, 1]} : vector<22x16xf32> to vector<16x16xf32>
    %548 = arith.index_cast %arg1 : i32 to index
    %c13 = arith.constant 13 : index
    %549 = memref.load %arg4[%548, %c13] : memref<4x99xf32, #tpu.memory_space<smem>>
    %550 = vector.broadcast %549 : f32 to vector<16x16xf32>
    %551 = arith.mulf %547, %550 : vector<16x16xf32>
    %552 = arith.addf %540, %551 : vector<16x16xf32>
    %553 = vector.extract_strided_slice %534 {offsets = [1, 0], sizes = [16, 16], strides = [1, 1]} : vector<22x16xf32> to vector<16x16xf32>
    %554 = arith.index_cast %arg1 : i32 to index
    %c62 = arith.constant 62 : index
    %555 = memref.load %arg4[%554, %c62] : memref<4x99xf32, #tpu.memory_space<smem>>
    %556 = vector.broadcast %555 : f32 to vector<16x16xf32>
    %557 = arith.mulf %553, %556 : vector<16x16xf32>
    %558 = arith.addf %546, %557 : vector<16x16xf32>
    %559 = vector.extract_strided_slice %533 {offsets = [2, 0], sizes = [16, 16], strides = [1, 1]} : vector<22x16xf32> to vector<16x16xf32>
    %560 = arith.index_cast %arg1 : i32 to index
    %c20 = arith.constant 20 : index
    %561 = memref.load %arg4[%560, %c20] : memref<4x99xf32, #tpu.memory_space<smem>>
    %562 = vector.broadcast %561 : f32 to vector<16x16xf32>
    %563 = arith.mulf %559, %562 : vector<16x16xf32>
    %564 = arith.addf %552, %563 : vector<16x16xf32>
    %565 = vector.extract_strided_slice %534 {offsets = [2, 0], sizes = [16, 16], strides = [1, 1]} : vector<22x16xf32> to vector<16x16xf32>
    %566 = arith.index_cast %arg1 : i32 to index
    %c69 = arith.constant 69 : index
    %567 = memref.load %arg4[%566, %c69] : memref<4x99xf32, #tpu.memory_space<smem>>
    %568 = vector.broadcast %567 : f32 to vector<16x16xf32>
    %569 = arith.mulf %565, %568 : vector<16x16xf32>
    %570 = arith.addf %558, %569 : vector<16x16xf32>
    %571 = vector.extract_strided_slice %533 {offsets = [3, 0], sizes = [16, 16], strides = [1, 1]} : vector<22x16xf32> to vector<16x16xf32>
    %572 = arith.index_cast %arg1 : i32 to index
    %c27 = arith.constant 27 : index
    %573 = memref.load %arg4[%572, %c27] : memref<4x99xf32, #tpu.memory_space<smem>>
    %574 = vector.broadcast %573 : f32 to vector<16x16xf32>
    %575 = arith.mulf %571, %574 : vector<16x16xf32>
    %576 = arith.addf %564, %575 : vector<16x16xf32>
    %577 = vector.extract_strided_slice %534 {offsets = [3, 0], sizes = [16, 16], strides = [1, 1]} : vector<22x16xf32> to vector<16x16xf32>
    %578 = arith.index_cast %arg1 : i32 to index
    %c76 = arith.constant 76 : index
    %579 = memref.load %arg4[%578, %c76] : memref<4x99xf32, #tpu.memory_space<smem>>
    %580 = vector.broadcast %579 : f32 to vector<16x16xf32>
    %581 = arith.mulf %577, %580 : vector<16x16xf32>
    %582 = arith.addf %570, %581 : vector<16x16xf32>
    %583 = vector.extract_strided_slice %533 {offsets = [4, 0], sizes = [16, 16], strides = [1, 1]} : vector<22x16xf32> to vector<16x16xf32>
    %584 = arith.index_cast %arg1 : i32 to index
    %c34 = arith.constant 34 : index
    %585 = memref.load %arg4[%584, %c34] : memref<4x99xf32, #tpu.memory_space<smem>>
    %586 = vector.broadcast %585 : f32 to vector<16x16xf32>
    %587 = arith.mulf %583, %586 : vector<16x16xf32>
    %588 = arith.addf %576, %587 : vector<16x16xf32>
    %589 = vector.extract_strided_slice %534 {offsets = [4, 0], sizes = [16, 16], strides = [1, 1]} : vector<22x16xf32> to vector<16x16xf32>
    %590 = arith.index_cast %arg1 : i32 to index
    %c83 = arith.constant 83 : index
    %591 = memref.load %arg4[%590, %c83] : memref<4x99xf32, #tpu.memory_space<smem>>
    %592 = vector.broadcast %591 : f32 to vector<16x16xf32>
    %593 = arith.mulf %589, %592 : vector<16x16xf32>
    %594 = arith.addf %582, %593 : vector<16x16xf32>
    %595 = vector.extract_strided_slice %533 {offsets = [5, 0], sizes = [16, 16], strides = [1, 1]} : vector<22x16xf32> to vector<16x16xf32>
    %596 = arith.index_cast %arg1 : i32 to index
    %c41 = arith.constant 41 : index
    %597 = memref.load %arg4[%596, %c41] : memref<4x99xf32, #tpu.memory_space<smem>>
    %598 = vector.broadcast %597 : f32 to vector<16x16xf32>
    %599 = arith.mulf %595, %598 : vector<16x16xf32>
    %600 = arith.addf %588, %599 : vector<16x16xf32>
    %601 = vector.extract_strided_slice %534 {offsets = [5, 0], sizes = [16, 16], strides = [1, 1]} : vector<22x16xf32> to vector<16x16xf32>
    %602 = arith.index_cast %arg1 : i32 to index
    %c90 = arith.constant 90 : index
    %603 = memref.load %arg4[%602, %c90] : memref<4x99xf32, #tpu.memory_space<smem>>
    %604 = vector.broadcast %603 : f32 to vector<16x16xf32>
    %605 = arith.mulf %601, %604 : vector<16x16xf32>
    %606 = arith.addf %594, %605 : vector<16x16xf32>
    %607 = vector.extract_strided_slice %533 {offsets = [6, 0], sizes = [16, 16], strides = [1, 1]} : vector<22x16xf32> to vector<16x16xf32>
    %608 = arith.index_cast %arg1 : i32 to index
    %c48 = arith.constant 48 : index
    %609 = memref.load %arg4[%608, %c48] : memref<4x99xf32, #tpu.memory_space<smem>>
    %610 = vector.broadcast %609 : f32 to vector<16x16xf32>
    %611 = arith.mulf %607, %610 : vector<16x16xf32>
    %612 = arith.addf %600, %611 : vector<16x16xf32>
    %613 = vector.extract_strided_slice %534 {offsets = [6, 0], sizes = [16, 16], strides = [1, 1]} : vector<22x16xf32> to vector<16x16xf32>
    %614 = arith.index_cast %arg1 : i32 to index
    %c97 = arith.constant 97 : index
    %615 = memref.load %arg4[%614, %c97] : memref<4x99xf32, #tpu.memory_space<smem>>
    %616 = vector.broadcast %615 : f32 to vector<16x16xf32>
    %617 = arith.mulf %613, %616 : vector<16x16xf32>
    %618 = arith.addf %606, %617 : vector<16x16xf32>
    %619 = arith.addf %612, %618 : vector<16x16xf32>
    %cst_18 = arith.constant -6.000000e+01 : f32
    %620 = vector.broadcast %cst_18 : f32 to vector<16x16xf32>
    %621 = arith.maximumf %619, %620 : vector<16x16xf32>
    %cst_19 = arith.constant 0.000000e+00 : f32
    %622 = vector.broadcast %cst_19 : f32 to vector<16x16xf32>
    %623 = arith.subf %622, %621 : vector<16x16xf32>
    %624 = math.exp %623 : vector<16x16xf32>
    %cst_20 = arith.constant 1.000000e+00 : f32
    %625 = vector.broadcast %cst_20 : f32 to vector<16x16xf32>
    %626 = arith.addf %625, %624 : vector<16x16xf32>
    %627 = tpu.reciprocal %626 {approx = true} : vector<16x16xf32> -> vector<16x16xf32>
    %628 = arith.mulf %626, %627 : vector<16x16xf32>
    %cst_21 = arith.constant 2.000000e+00 : f32
    %629 = vector.broadcast %cst_21 : f32 to vector<16x16xf32>
    %630 = arith.subf %629, %628 : vector<16x16xf32>
    %631 = arith.mulf %627, %630 : vector<16x16xf32>
    %c0_22 = arith.constant 0 : index
    %c0_23 = arith.constant 0 : index
    %c0_24 = arith.constant 0 : index
    %c0_25 = arith.constant 0 : index
    %c0_26 = arith.constant 0 : index
    %632 = vector.load %arg8[%c0_22, %c0_23, %c0_24, %c0_25, %c0_26] : memref<1x1x1x16x16xf32, #tpu.memory_space<vmem>>, vector<1x1x1x16x16xf32>
    %633 = vector.shape_cast %632 : vector<1x1x1x16x16xf32> to vector<16x16xf32>
    %634 = vector.shape_cast %631 : vector<16x16xf32> to vector<1x1x1x16x16xf32>
    tpu.vector_store %arg8[%c0_22, %c0_23, %c0_24, %c0_25, %c0_26], %634 {strides = array<i32>} : memref<1x1x1x16x16xf32, #tpu.memory_space<vmem>>, vector<1x1x1x16x16xf32>,
    return
  }
  func.func @transform_0(%arg0: i32, %arg1: i32, %arg2: i32) -> (i32, i32) {
    %c0_i32 = arith.constant 0 : i32
    %c0_i32_0 = arith.constant 0 : i32
    %c0_i32_1 = arith.constant 0 : i32
    return %c0_i32, %c0_i32_0 : i32, i32
  }
  func.func @transform_1(%arg0: i32, %arg1: i32, %arg2: i32) -> (i32, i32) {
    %c0_i32 = arith.constant 0 : i32
    %c0_i32_0 = arith.constant 0 : i32
    %c0_i32_1 = arith.constant 0 : i32
    return %c0_i32, %c0_i32_0 : i32, i32
  }
  func.func @transform_2(%arg0: i32, %arg1: i32, %arg2: i32) -> (i32, i32, i32, i32, i32) {
    %c0_i32 = arith.constant 0 : i32
    %c0_i32_0 = arith.constant 0 : i32
    %c0_i32_1 = arith.constant 0 : i32
    return %arg0, %arg1, %arg2, %c0_i32, %c0_i32_0 : i32, i32, i32, i32, i32
  }
  func.func @transform_3(%arg0: i32, %arg1: i32, %arg2: i32) -> (i32, i32, i32, i32, i32) {
    %c0_i32 = arith.constant 0 : i32
    %c0_i32_0 = arith.constant 0 : i32
    %c0_i32_1 = arith.constant 0 : i32
    return %arg0, %arg1, %arg2, %c0_i32, %c0_i32_0 : i32, i32, i32, i32, i32
  }
  func.func @transform_4(%arg0: i32, %arg1: i32, %arg2: i32) -> (i32, i32, i32, i32, i32) {
    %c0_i32 = arith.constant 0 : i32
    %c0_i32_0 = arith.constant 0 : i32
    %c0_i32_1 = arith.constant 0 : i32
    return %arg0, %arg1, %arg2, %c0_i32, %c0_i32_0 : i32, i32, i32, i32, i32
  }
  func.func @transform_5(%arg0: i32, %arg1: i32, %arg2: i32) -> (i32, i32, i32, i32, i32) {
    %c0_i32 = arith.constant 0 : i32
    %c0_i32_0 = arith.constant 0 : i32
    %c0_i32_1 = arith.constant 0 : i32
    return %arg0, %arg1, %arg2, %c0_i32, %c0_i32_0 : i32, i32, i32, i32, i32
  }
}

</mosaic_0001>

<llo_original>
// kernel: squeeze.2
$region0: #{squeeze.2}
  %s0 = inlined_call_operand.vmem [shape: f32[4,7,7], index: 0, kind: input, shape index: {}]
  %s1 = inlined_call_operand.vmem [shape: f32[4,49], index: 1, kind: output, shape index: {}]
  $region1: #{squeeze.2} parent=0
    #allocation0 [shape = 'u8[4096]{0}', space=vmem, size = 0x1000, scoped, tag = 'scoped mem for output reshape']
    %v2 = vld [vmem:[%s0] ss:$8 sm:$0xf]
    %vm3 = vcmask 56320
    %4 = vst.msk [vmem:[#allocation0] sm:$0xf] %vm3, %v2
    %s5 = scalar_lea.vmem %s0, 6
    %v6 = vld [vmem:[%s5] ss:$8 sm:$0xf]
    %7 = vrot.lane.b32.xlu0 %v6, 42
    %v8 = vpop.permute.xlu0 %7
    %vm9 = vcmask 400720
    %10 = vst.msk [vmem:[#allocation0] sm:$0xf] %vm9, %v8
    %s11 = scalar_lea.vmem %s0, 5
    %v12 = vld [vmem:[%s11] ss:$8 sm:$0xf]
    %13 = vrot.lane.b32.xlu0 %v12, 35
    %v14 = vpop.permute.xlu0 %13
    %vm15 = vcmask 343320
    %16 = vst.msk [vmem:[#allocation0] sm:$0xf] %vm15, %v14
    %s17 = scalar_lea.vmem %s0, 4
    %v18 = vld [vmem:[%s17] ss:$8 sm:$0xf]
    %19 = vrot.lane.b32.xlu0 %v18, 28
    %v20 = vpop.permute.xlu0 %19
    %vm21 = vcmask 285920
    %22 = vst.msk [vmem:[#allocation0] sm:$0xf] %vm21, %v20
    %s23 = scalar_lea.vmem %s0, 3
    %v24 = vld [vmem:[%s23] ss:$8 sm:$0xf]
    %25 = vrot.lane.b32.xlu0 %v24, 21
    %v26 = vpop.permute.xlu0 %25
    %vm27 = vcmask 228520
    %28 = vst.msk [vmem:[#allocation0] sm:$0xf] %vm27, %v26
    %s29 = scalar_lea.vmem %s0, 2
    %v30 = vld [vmem:[%s29] ss:$8 sm:$0xf]
    %31 = vrot.lane.b32.xlu0 %v30, 14
    %v32 = vpop.permute.xlu0 %31
    %vm33 = vcmask 171120
    %34 = vst.msk [vmem:[#allocation0] sm:$0xf] %vm33, %v32
    %s35 = scalar_lea.vmem %s0, 1
    %v36 = vld [vmem:[%s35] ss:$8 sm:$0xf]
    %37 = vrot.lane.b32.xlu0 %v36, 7
    %v38 = vpop.permute.xlu0 %37
    %vm39 = vcmask 113720
    %40 = vst.msk [vmem:[#allocation0] sm:$0xf] %vm39, %v38
    %s42 = sshll.u32 1, 4
    %s43 = ssub.s32 %s42, 1
    %v45 = vld [vmem:[#allocation0] sm:%s43]
    %s46 = sshll.u32 1, 4
    %s47 = ssub.s32 %s46, 1
    %48 = vst [vmem:[%s1] sm:%s47] %v45

// kernel: pixel_attention_cga.1
$region0: #{pixel_attention_cga.1}
  #allocation0 [shape = 'u32[]', space=smem, size = 0x4, offset = 0x4, fixed_abs, tag = 'smem constant byte address 0x4 - core index']
  #allocation1 [shape = 'u32[144,128]{1,0:T(1,128)}', space=vmem, size = 0x12000, scoped, tag = 'internal scratch']
  #allocation2 [shape = 'f32[1,1]{1,0:T(1,128)S(6)}', space=smem, size = 0x200, scoped, tag = 'scoped memory for pixel_attention_cga.1']
  %s0 = inlined_call_operand.<no memory space> [shape: f32[1,1], index: 0, kind: input, shape index: {}]
  %s1 = inlined_call_operand.vmem [shape: f32[4,99], index: 1, kind: input, shape index: {}]
  %s2 = inlined_call_operand.vmem [shape: f32[2,4,1,22,22], index: 2, kind: input, shape index: {}]
  %s3 = inlined_call_operand.vmem [shape: f32[2,4,1,22,22], index: 3, kind: input, shape index: {}]
  %s4 = inlined_call_operand.vmem [shape: f32[2,4,1,22,22], index: 4, kind: input, shape index: {}]
  %s5 = inlined_call_operand.hbm [shape: f32[2,4,1,16,16], index: 5, kind: output, shape index: {}]
  %s6 = sld [smem:[#allocation0]]
  $region57: #{pixel_attention_cga.1} parent=0
    _
  %s8 = ssub.s32 1, %s6
  %s9 = scalar_select 0, %s8, %s6
  %10 = sst [smem:[#allocation2]] %s0
  $region1: #{pixel_attention_cga.1} parent=0
    #allocation3 [shape = 'u8[2048]{0}', space=smem, size = 0x800, scoped, tag = 'input window, operand 1, single buffered']
    #allocation4 [shape = 's32[2]{0}', space=sflag, size = 0x8, scoped, tag = 'scoped memory for pixel_attention_cga.1']
    #allocation5 [shape = 's32[2]{0}', space=sflag, size = 0x8, scoped, tag = 'scoped memory for pixel_attention_cga.1']
    #allocation6 [shape = 'u8[16384]{0}', space=vmem, size = 0x4000, scoped, tag = 'output window, operand 0']
    %11 = vsyncpa [#allocation5], 0
    %12 = vsyncpa [#allocation4], 0
    %s13 = scalar_lea.sflag [#allocation4], 1
    %14 = vsyncpa %s13, 0
    loop: start=0, step=1, limit=10
    $region2: #{pixel_attention_cga.1} parent=1 // loop_pre_header
      _
    $region3: #{pixel_attention_cga.1} parent=1 // loop_header
      %s16 = sphi 0, %s20
      %p17 = scmp.ge.s32.totalorder %s16, 10
      %s23 = sphi 0, %s42
      %s24 = sphi 0, %s38
      %s25 = sphi 0, %s34
      %s26 = sphi 0, %s23
      %s27 = sphi 0, %s24
      %s28 = sphi 0, %s25
      %s29 = sphi 0, %s26
      %s30 = sphi 0, %s27
      %s31 = sphi 0, %s28
      %s43 = sphi 0, %s43
      %s45 = sphi 0, %s43
      %s46 = sphi 0, %s45
      %s60 = sphi 0, %s46
      %s64 = sphi 0, %s64
      %s66 = sphi 0, %s64
      %s67 = sphi 0, %s66
      %s81 = sphi 0, %s67
      %s91 = sphi 0, %s93
      %s94 = sphi 0, %s91
      %s95 = sphi 0, %s94
      %s111 = sphi 0, %s95
      %s121 = sphi 0, %s123
      %s124 = sphi 0, %s121
      %s125 = sphi 0, %s124
      %s141 = sphi 0, %s125
      %s151 = sphi 0, %s153
      %s154 = sphi 0, %s151
      %s155 = sphi 0, %s154
      %s171 = sphi 0, %s155
      %s181 = sphi 0, %s183
      %s184 = sphi 0, %s181
      %s185 = sphi 0, %s184
      %s201 = sphi 0, %s185
    $region4: #{pixel_attention_cga.1} parent=1 // loop_header_branch
      %19 = sbr.rel (%p17) target = $region8
    $region5: #{pixel_attention_cga.1} parent=1 // loop_body
      %s21 = ssub.s32 %s16, 1
      %s22 = ssub.s32 %s16, 2
      %s32 = sadd.s32 1, %s25
      %p33 = scmp.ge.s32.totalorder %s32, 1
      %s34 = scalar_select %p33, 0, %s32
      %s35 = sadd.s32 1, %s24
      %s36 = scalar_select %p33, %s35, %s24
      %p37 = scmp.ge.s32.totalorder %s36, 4
      %s38 = scalar_select %p37, 0, %s36
      %s39 = sadd.s32 1, %s23
      %s40 = scalar_select %p37, %s39, %s23
      %p41 = scmp.ge.s32.totalorder %s40, 2
      %s42 = scalar_select %p41, 0, %s40
      %s44 = sadd.s32 %s43, 1
      %p47 = scmp.eq.s32.totalorder %s16, 7
      %p48 = scmp.ne.s32.totalorder %s43, %s45
      %p49 = scmp.eq.s32.totalorder %s16, 0
      %p50 = por %p48, %p49
      %p51 = scmp.ne.s32.totalorder %s43, %s45
      %p52 = scmp.eq.s32.totalorder %s21, 7
      %p53 = por %p51, %p52
      %p54 = scmp.ne.s32.totalorder %s45, %s46
      %p55 = scmp.eq.s32.totalorder %s21, 0
      %p56 = por %p54, %p55
      %p57 = scmp.ne.s32.totalorder %s45, %s46
      %p58 = scmp.eq.s32.totalorder %s22, 7
      %p59 = por %p57, %p58
      %p61 = scmp.ne.s32.totalorder %s46, %s60
      %p62 = scmp.eq.s32.totalorder %s22, 0
      %p63 = por %p61, %p62
      %s65 = sadd.s32 %s64, 1
      %p68 = scmp.eq.s32.totalorder %s16, 7
      %p69 = scmp.ne.s32.totalorder %s64, %s66
      %p70 = scmp.eq.s32.totalorder %s16, 0
      %p71 = por %p69, %p70
      %p72 = scmp.ne.s32.totalorder %s64, %s66
      %p73 = scmp.eq.s32.totalorder %s21, 7
      %p74 = por %p72, %p73
      %p75 = scmp.ne.s32.totalorder %s66, %s67
      %p76 = scmp.eq.s32.totalorder %s21, 0
      %p77 = por %p75, %p76
      %p78 = scmp.ne.s32.totalorder %s66, %s67
      %p79 = scmp.eq.s32.totalorder %s22, 7
      %p80 = por %p78, %p79
      %p82 = scmp.ne.s32.totalorder %s67, %s81
      %p83 = scmp.eq.s32.totalorder %s22, 0
      %p84 = por %p82, %p83
      %s85 = ssub.s32 %s23, %s42
      %s86 = ssub.s32 %s24, %s38
      %s87 = sor.u32 %s85, %s86
      %s88 = ssub.s32 %s25, %s34
      %s89 = sor.u32 %s87, %s88
      %p90 = scmp.eq.s32.totalorder %s89, 0
      %s92 = sadd.s32 %s91, 1
      %s93 = scalar_select %p90, %s91, %s92
      %p96 = pneg %p90
      %p97 = scmp.eq.s32.totalorder %s16, 7
      %p98 = por %p96, %p97
      %p99 = scmp.ne.s32.totalorder %s91, %s94
      %p100 = scmp.eq.s32.totalorder %s16, 0
      %p101 = por %p99, %p100
      %p102 = scmp.ne.s32.totalorder %s91, %s94
      %p103 = scmp.eq.s32.totalorder %s21, 7
      %p104 = por %p102, %p103
      %p105 = scmp.ne.s32.totalorder %s94, %s95
      %p106 = scmp.eq.s32.totalorder %s21, 0
      %p107 = por %p105, %p106
      %p108 = scmp.ne.s32.totalorder %s94, %s95
      %p109 = scmp.eq.s32.totalorder %s22, 7
      %p110 = por %p108, %p109
      %p112 = scmp.ne.s32.totalorder %s95, %s111
      %p113 = scmp.eq.s32.totalorder %s22, 0
      %p114 = por %p112, %p113
      %s115 = ssub.s32 %s23, %s42
      %s116 = ssub.s32 %s24, %s38
      %s117 = sor.u32 %s115, %s116
      %s118 = ssub.s32 %s25, %s34
      %s119 = sor.u32 %s117, %s118
      %p120 = scmp.eq.s32.totalorder %s119, 0
      %s122 = sadd.s32 %s121, 1
      %s123 = scalar_select %p120, %s121, %s122
      %p126 = pneg %p120
      %p127 = scmp.eq.s32.totalorder %s16, 7
      %p128 = por %p126, %p127
      %p129 = scmp.ne.s32.totalorder %s121, %s124
      %p130 = scmp.eq.s32.totalorder %s16, 0
      %p131 = por %p129, %p130
      %p132 = scmp.ne.s32.totalorder %s121, %s124
      %p133 = scmp.eq.s32.totalorder %s21, 7
      %p134 = por %p132, %p133
      %p135 = scmp.ne.s32.totalorder %s124, %s125
      %p136 = scmp.eq.s32.totalorder %s21, 0
      %p137 = por %p135, %p136
      %p138 = scmp.ne.s32.totalorder %s124, %s125
      %p139 = scmp.eq.s32.totalorder %s22, 7
      %p140 = por %p138, %p139
      %p142 = scmp.ne.s32.totalorder %s125, %s141
      %p143 = scmp.eq.s32.totalorder %s22, 0
      %p144 = por %p142, %p143
      %s145 = ssub.s32 %s23, %s42
      %s146 = ssub.s32 %s24, %s38
      %s147 = sor.u32 %s145, %s146
      %s148 = ssub.s32 %s25, %s34
      %s149 = sor.u32 %s147, %s148
      %p150 = scmp.eq.s32.totalorder %s149, 0
      %s152 = sadd.s32 %s151, 1
      %s153 = scalar_select %p150, %s151, %s152
      %p156 = pneg %p150
      %p157 = scmp.eq.s32.totalorder %s16, 7
      %p158 = por %p156, %p157
      %p159 = scmp.ne.s32.totalorder %s151, %s154
      %p160 = scmp.eq.s32.totalorder %s16, 0
      %p161 = por %p159, %p160
      %p162 = scmp.ne.s32.totalorder %s151, %s154
      %p163 = scmp.eq.s32.totalorder %s21, 7
      %p164 = por %p162, %p163
      %p165 = scmp.ne.s32.totalorder %s154, %s155
      %p166 = scmp.eq.s32.totalorder %s21, 0
      %p167 = por %p165, %p166
      %p168 = scmp.ne.s32.totalorder %s154, %s155
      %p169 = scmp.eq.s32.totalorder %s22, 7
      %p170 = por %p168, %p169
      %p172 = scmp.ne.s32.totalorder %s155, %s171
      %p173 = scmp.eq.s32.totalorder %s22, 0
      %p174 = por %p172, %p173
      %s175 = ssub.s32 %s23, %s42
      %s176 = ssub.s32 %s24, %s38
      %s177 = sor.u32 %s175, %s176
      %s178 = ssub.s32 %s25, %s34
      %s179 = sor.u32 %s177, %s178
      %p180 = scmp.eq.s32.totalorder %s179, 0
      %s182 = sadd.s32 %s181, 1
      %s183 = scalar_select %p180, %s181, %s182
      %p186 = pneg %p180
      %p187 = scmp.eq.s32.totalorder %s16, 7
      %p188 = por %p186, %p187
      %p189 = scmp.ne.s32.totalorder %s181, %s184
      %p190 = scmp.eq.s32.totalorder %s16, 0
      %p191 = por %p189, %p190
      %p192 = scmp.ne.s32.totalorder %s181, %s184
      %p193 = scmp.eq.s32.totalorder %s21, 7
      %p194 = por %p192, %p193
      %p195 = scmp.ne.s32.totalorder %s184, %s185
      %p196 = scmp.eq.s32.totalorder %s21, 0
      %p197 = por %p195, %p196
      %p198 = scmp.ne.s32.totalorder %s184, %s185
      %p199 = scmp.eq.s32.totalorder %s22, 7
      %p200 = por %p198, %p199
      %p202 = scmp.ne.s32.totalorder %s185, %s201
      %p203 = scmp.eq.s32.totalorder %s22, 0
      %p204 = por %p202, %p203
      %p205 = scmp.le.s32.totalorder 1, %s16
      %p206 = scmp.lt.s32.totalorder %s16, 9
      %p207 = pnand %p205, %p206
      %p208 = pneg %p207
      // Predicated region
      $region9: #{pixel_attention_cga.1} parent=5 // pred_check
        _
      $region10: #{pixel_attention_cga.1} parent=5 // pred_check_branch
        %210 = sbr.rel (%p207) target = $region12
      $region11: #{pixel_attention_cga.1} parent=5 // pred_region
        %s211 = ssub.s32 %s16, 1
        // Predicated region
        $region13: #{pixel_attention_cga.1} parent=11 // pred_check
          %p212 = pneg %p56
        $region14: #{pixel_attention_cga.1} parent=11 // pred_check_branch
          %214 = sbr.rel (%p212) target = $region16
        $region15: #{pixel_attention_cga.1} parent=11 // pred_region
          _
        $region16: #{pixel_attention_cga.1} parent=11 // pred_fallthru
          _
        // Predicated region
        $region17: #{pixel_attention_cga.1} parent=11 // pred_check
          %p215 = pneg %p77
        $region18: #{pixel_attention_cga.1} parent=11 // pred_check_branch
          %217 = sbr.rel (%p215) target = $region20
        $region19: #{pixel_attention_cga.1} parent=11 // pred_region
          %s219 = ssub.s32 64, 64
          %220 = vsyncadd [#allocation5], %s219
          %s222 = sshll.u32 %s1, 4
          %s223 = int_to_ptr.vmem [resolvable:$true] %s222
          %225 = dma.vmem_to_smem %s223, 64, [#allocation3], [#allocation5]
        $region20: #{pixel_attention_cga.1} parent=11 // pred_fallthru
          _
      $region12: #{pixel_attention_cga.1} parent=5 // pred_fallthru
        _
      %p226 = scmp.lt.s32.totalorder %s16, 8
      // Predicated region
      $region21: #{pixel_attention_cga.1} parent=5 // pred_check
        %p227 = pneg %p226
      $region22: #{pixel_attention_cga.1} parent=5 // pred_check_branch
        %229 = sbr.rel (%p227) target = $region24
      $region23: #{pixel_attention_cga.1} parent=5 // pred_region
        // Predicated region
        $region25: #{pixel_attention_cga.1} parent=23 // pred_check
          %p230 = pneg %p101
        $region26: #{pixel_attention_cga.1} parent=23 // pred_check_branch
          %232 = sbr.rel (%p230) target = $region28
        $region27: #{pixel_attention_cga.1} parent=23 // pred_region
          %p233 = scmp.lt.s32.totalorder %s23, 1
          %s234 = scalar_select %p233, %s23, 1
          %p235 = scmp.lt.s32.totalorder %s24, 3
          %s236 = scalar_select %p235, %s24, 3
          %p237 = scmp.lt.s32.totalorder %s25, 0
          %s238 = scalar_select %p237, %s25, 0
          %s239 = smul.addr %s238, 3
          %s240 = smul.addr %s236, 3
          %s241 = sadd.s32 %s239, %s240
          %s242 = smul.addr %s234, 12
          %s243 = sadd.s32 %s241, %s242
          %s244 = smul.addr %s243, 8
          %s245 = scalar_lea.vmem %s2, %s244
        $region28: #{pixel_attention_cga.1} parent=23 // pred_fallthru
          _
        // Predicated region
        $region29: #{pixel_attention_cga.1} parent=23 // pred_check
          %p246 = pneg %p131
        $region30: #{pixel_attention_cga.1} parent=23 // pred_check_branch
          %248 = sbr.rel (%p246) target = $region32
        $region31: #{pixel_attention_cga.1} parent=23 // pred_region
          %p249 = scmp.lt.s32.totalorder %s23, 1
          %s250 = scalar_select %p249, %s23, 1
          %p251 = scmp.lt.s32.totalorder %s24, 3
          %s252 = scalar_select %p251, %s24, 3
          %p253 = scmp.lt.s32.totalorder %s25, 0
          %s254 = scalar_select %p253, %s25, 0
          %s255 = smul.addr %s254, 3
          %s256 = smul.addr %s252, 3
          %s257 = sadd.s32 %s255, %s256
          %s258 = smul.addr %s250, 12
          %s259 = sadd.s32 %s257, %s258
          %s260 = smul.addr %s259, 8
          %s261 = scalar_lea.vmem %s3, %s260
        $region32: #{pixel_attention_cga.1} parent=23 // pred_fallthru
          _
        // Predicated region
        $region33: #{pixel_attention_cga.1} parent=23 // pred_check
          %p262 = pneg %p161
        $region34: #{pixel_attention_cga.1} parent=23 // pred_check_branch
          %264 = sbr.rel (%p262) target = $region36
        $region35: #{pixel_attention_cga.1} parent=23 // pred_region
          %p265 = scmp.lt.s32.totalorder %s23, 1
          %s266 = scalar_select %p265, %s23, 1
          %p267 = scmp.lt.s32.totalorder %s24, 3
          %s268 = scalar_select %p267, %s24, 3
          %p269 = scmp.lt.s32.totalorder %s25, 0
          %s270 = scalar_select %p269, %s25, 0
          %s271 = smul.addr %s270, 3
          %s272 = smul.addr %s268, 3
          %s273 = sadd.s32 %s271, %s272
          %s274 = smul.addr %s266, 12
          %s275 = sadd.s32 %s273, %s274
          %s276 = smul.addr %s275, 8
          %s277 = scalar_lea.vmem %s4, %s276
        $region36: #{pixel_attention_cga.1} parent=23 // pred_fallthru
          _
      $region24: #{pixel_attention_cga.1} parent=5 // pred_fallthru
        _
      %p278 = scmp.le.s32.totalorder 1, %s16
      %p279 = scmp.lt.s32.totalorder %s16, 9
      %p280 = pnand %p278, %p279
      %p281 = pneg %p280
      // Predicated region
      $region37: #{pixel_attention_cga.1} parent=5 // pred_check
        _
      $region38: #{pixel_attention_cga.1} parent=5 // pred_check_branch
        %283 = sbr.rel (%p280) target = $region40
      $region39: #{pixel_attention_cga.1} parent=5 // pred_region
        %s284 = ssub.s32 %s16, 1
        // Predicated region
        $region41: #{pixel_attention_cga.1} parent=39 // pred_check
          %p285 = pneg %p77
        $region42: #{pixel_attention_cga.1} parent=39 // pred_check_branch
          %287 = sbr.rel (%p285) target = $region44
        $region43: #{pixel_attention_cga.1} parent=39 // pred_region
          %288 = dma.done [#allocation5], 64
        $region44: #{pixel_attention_cga.1} parent=39 // pred_fallthru
          _
        %289 = sfence
        %p290 = pneg %p56
        %p291 = pneg %p53
        %p292 = pneg %p77
        %p293 = pneg %p74
        %p294 = scmp.lt.s32.totalorder %s26, 1
        %s295 = scalar_select %p294, %s26, 1
        %p296 = scmp.lt.s32.totalorder %s27, 3
        %s297 = scalar_select %p296, %s27, 3
        %p298 = scmp.lt.s32.totalorder %s28, 0
        %s299 = scalar_select %p298, %s28, 0
        %s300 = smul.addr %s299, 3
        %s301 = smul.addr %s297, 3
        %s302 = sadd.s32 %s300, %s301
        %s303 = smul.addr %s295, 12
        %s304 = sadd.s32 %s302, %s303
        %s305 = smul.addr %s304, 8
        %s306 = scalar_lea.vmem %s2, %s305
        %p307 = pneg %p107
        %p308 = pneg %p104
        %p309 = scmp.lt.s32.totalorder %s26, 1
        %s310 = scalar_select %p309, %s26, 1
        %p311 = scmp.lt.s32.totalorder %s27, 3
        %s312 = scalar_select %p311, %s27, 3
        %p313 = scmp.lt.s32.totalorder %s28, 0
        %s314 = scalar_select %p313, %s28, 0
        %s315 = smul.addr %s314, 3
        %s316 = smul.addr %s312, 3
        %s317 = sadd.s32 %s315, %s316
        %s318 = smul.addr %s310, 12
        %s319 = sadd.s32 %s317, %s318
        %s320 = smul.addr %s319, 8
        %s321 = scalar_lea.vmem %s3, %s320
        %p322 = pneg %p137
        %p323 = pneg %p134
        %p324 = scmp.lt.s32.totalorder %s26, 1
        %s325 = scalar_select %p324, %s26, 1
        %p326 = scmp.lt.s32.totalorder %s27, 3
        %s327 = scalar_select %p326, %s27, 3
        %p328 = scmp.lt.s32.totalorder %s28, 0
        %s329 = scalar_select %p328, %s28, 0
        %s330 = smul.addr %s329, 3
        %s331 = smul.addr %s327, 3
        %s332 = sadd.s32 %s330, %s331
        %s333 = smul.addr %s325, 12
        %s334 = sadd.s32 %s332, %s333
        %s335 = smul.addr %s334, 8
        %s336 = scalar_lea.vmem %s4, %s335
        %p337 = pneg %p167
        %p338 = pneg %p164
        %p339 = pneg %p197
        %p340 = pneg %p194
        %s341 = sand.u32 %s184, 1
        %s342 = scalar_lea.sflag [#allocation4], %s341
        %s343 = sand.u32 %s184, 1
        %s344 = smul.addr %s343, 16
        %s345 = scalar_lea.vmem [#allocation6], %s344
        %p346 = scmp.lt.s32.totalorder %s26, 1
        %s347 = scalar_select %p346, %s26, 1
        %p348 = scmp.lt.s32.totalorder %s27, 3
        %s349 = scalar_select %p348, %s27, 3
        %p350 = scmp.lt.s32.totalorder %s28, 0
        %s351 = scalar_select %p350, %s28, 0
        %s352 = smul.addr %s351, 3
        %s353 = smul.addr %s349, 3
        %s354 = sadd.s32 %s352, %s353
        %s355 = smul.addr %s347, 12
        %s356 = sadd.s32 %s354, %s355
        %s357 = smul.addr %s356, 8
        %s358 = scalar_lea.vmem %s2, %s357
        %p359 = scmp.lt.s32.totalorder %s26, 1
        %s360 = scalar_select %p359, %s26, 1
        %p361 = scmp.lt.s32.totalorder %s27, 3
        %s362 = scalar_select %p361, %s27, 3
        %p363 = scmp.lt.s32.totalorder %s28, 0
        %s364 = scalar_select %p363, %s28, 0
        %s365 = smul.addr %s364, 3
        %s366 = smul.addr %s362, 3
        %s367 = sadd.s32 %s365, %s366
        %s368 = smul.addr %s360, 12
        %s369 = sadd.s32 %s367, %s368
        %s370 = smul.addr %s369, 8
        %s371 = scalar_lea.vmem %s3, %s370
        %p372 = scmp.lt.s32.totalorder %s26, 1
        %s373 = scalar_select %p372, %s26, 1
        %p374 = scmp.lt.s32.totalorder %s27, 3
        %s375 = scalar_select %p374, %s27, 3
        %p376 = scmp.lt.s32.totalorder %s28, 0
        %s377 = scalar_select %p376, %s28, 0
        %s378 = smul.addr %s377, 3
        %s379 = smul.addr %s375, 3
        %s380 = sadd.s32 %s378, %s379
        %s381 = smul.addr %s373, 12
        %s382 = sadd.s32 %s380, %s381
        %s383 = smul.addr %s382, 8
        %s384 = scalar_lea.vmem %s4, %s383
        %s385 = sld [smem:[#allocation2]]
        %v386 = vld [vmem:[%s358] sm:$0xff]
        %v387 = vld [vmem:[%s358 + $0x8] sm:$0xff]
        %v388 = vld [vmem:[%s358 + $0x10] sm:$0x3f]
        %v389 = vld [vmem:[%s371] sm:$0xff]
        %v390 = vld [vmem:[%s371 + $0x8] sm:$0xff]
        %v391 = vld [vmem:[%s371 + $0x10] sm:$0x3f]
        %v392 = vstv %s385
        %v393 = vmul.f32 %v386, %v392
        %v394 = vmul.f32 %v387, %v392
        %v395 = vmul.f32 %v388, %v392
        %s396 = ssub.f32 1.0, %s385
        %v397 = vstv %s396
        %v398 = vmul.f32 %v389, %v397
        %v399 = vmul.f32 %v390, %v397
        %v400 = vmul.f32 %v391, %v397
        %v401 = vadd.f32 %v393, %v398
        %v402 = vadd.f32 %v394, %v399
        %v403 = vadd.f32 %v395, %v400
        %v404 = vld [vmem:[%s384] sm:$0xff]
        %v405 = vld [vmem:[%s384 + $0x8] sm:$0xff]
        %v406 = vld [vmem:[%s384 + $0x10] sm:$0x3f]
        %s407 = smul.u32 %s27, 128
        %s408 = sadd.s32 %s407, 98
        %s409 = sld [smem:[#allocation3 + %s408]]
        %v410 = vstv %s409
        %s411 = sld [smem:[#allocation3 + %s407]]
        %v412 = vstv %s411
        %v413 = vmul.f32 %v401, %v412
        %v414 = vmul.f32 %v402, %v412
        %v415 = vadd.f32 %v410, %v413
        %v416 = vadd.f32 %v410, %v414
        %s417 = sadd.s32 %s407, 49
        %s418 = sld [smem:[#allocation3 + %s417]]
        %v419 = vstv %s418
        %v420 = vmul.f32 %v404, %v419
        %v421 = vmul.f32 %v405, %v419
        %v422 = vadd.f32 %v420, 0.0
        %v423 = vadd.f32 %v421, 0.0
        %s424 = sadd.s32 %s407, 7
        %s425 = sld [smem:[#allocation3 + %s424]]
        %v426 = vstv %s425
        %v427 = vmul.f32 %v401, %v426
        %v428 = vmul.f32 %v402, %v426
        %v429 = vmul.f32 %v403, %v426
        %vm433 = vcmask 1046528
        %v434 = vrot.slane %v427, 1
        %v435 = vrot.slane %v428, 1
        %v436 = vsel %vm433, %v434, %v435
        %v437 = vrot.slane %v429, 1
        %v438 = vsel %vm433, %v435, %v437
        %v441 = vadd.f32 %v415, %v436
        %v442 = vadd.f32 %v416, %v438
        %s443 = sadd.s32 %s407, 56
        %s444 = sld [smem:[#allocation3 + %s443]]
        %v445 = vstv %s444
        %v446 = vmul.f32 %v404, %v445
        %v447 = vmul.f32 %v405, %v445
        %v448 = vmul.f32 %v406, %v445
        %v452 = vrot.slane %v446, 1
        %v453 = vrot.slane %v447, 1
        %v454 = vsel %vm433, %v452, %v453
        %v455 = vrot.slane %v448, 1
        %v456 = vsel %vm433, %v453, %v455
        %v459 = vadd.f32 %v422, %v454
        %v460 = vadd.f32 %v423, %v456
        %s461 = sadd.s32 %s407, 14
        %s462 = sld [smem:[#allocation3 + %s461]]
        %v463 = vstv %s462
        %v464 = vmul.f32 %v401, %v463
        %v465 = vmul.f32 %v402, %v463
        %v466 = vmul.f32 %v403, %v463
        %vm470 = vcmask 1045504
        %v471 = vrot.slane %v464, 2
        %v472 = vrot.slane %v465, 2
        %v473 = vsel %vm470, %v471, %v472
        %v474 = vrot.slane %v466, 2
        %v475 = vsel %vm470, %v472, %v474
        %v478 = vadd.f32 %v441, %v473
        %v479 = vadd.f32 %v442, %v475
        %s480 = sadd.s32 %s407, 63
        %s481 = sld [smem:[#allocation3 + %s480]]
        %v482 = vstv %s481
        %v483 = vmul.f32 %v404, %v482
        %v484 = vmul.f32 %v405, %v482
        %v485 = vmul.f32 %v406, %v482
        %v489 = vrot.slane %v483, 2
        %v490 = vrot.slane %v484, 2
        %v491 = vsel %vm470, %v489, %v490
        %v492 = vrot.slane %v485, 2
        %v493 = vsel %vm470, %v490, %v492
        %v496 = vadd.f32 %v459, %v491
        %v497 = vadd.f32 %v460, %v493
        %s498 = sadd.s32 %s407, 21
        %s499 = sld [smem:[#allocation3 + %s498]]
        %v500 = vstv %s499
        %v501 = vmul.f32 %v401, %v500
        %v502 = vmul.f32 %v402, %v500
        %v503 = vmul.f32 %v403, %v500
        %vm507 = vcmask 1044480
        %v508 = vrot.slane %v501, 3
        %v509 = vrot.slane %v502, 3
        %v510 = vsel %vm507, %v508, %v509
        %v511 = vrot.slane %v503, 3
        %v512 = vsel %vm507, %v509, %v511
        %v515 = vadd.f32 %v478, %v510
        %v516 = vadd.f32 %v479, %v512
        %s517 = sadd.s32 %s407, 70
        %s518 = sld [smem:[#allocation3 + %s517]]
        %v519 = vstv %s518
        %v520 = vmul.f32 %v404, %v519
        %v521 = vmul.f32 %v405, %v519
        %v522 = vmul.f32 %v406, %v519
        %v526 = vrot.slane %v520, 3
        %v527 = vrot.slane %v521, 3
        %v528 = vsel %vm507, %v526, %v527
        %v529 = vrot.slane %v522, 3
        %v530 = vsel %vm507, %v527, %v529
        %v533 = vadd.f32 %v496, %v528
        %v534 = vadd.f32 %v497, %v530
        %s535 = sadd.s32 %s407, 28
        %s536 = sld [smem:[#allocation3 + %s535]]
        %v537 = vstv %s536
        %v538 = vmul.f32 %v401, %v537
        %v539 = vmul.f32 %v402, %v537
        %v540 = vmul.f32 %v403, %v537
        %vm544 = vcmask 1043456
        %v545 = vrot.slane %v538, 4
        %v546 = vrot.slane %v539, 4
        %v547 = vsel %vm544, %v545, %v546
        %v548 = vrot.slane %v540, 4
        %v549 = vsel %vm544, %v546, %v548
        %v552 = vadd.f32 %v515, %v547
        %v553 = vadd.f32 %v516, %v549
        %s554 = sadd.s32 %s407, 77
        %s555 = sld [smem:[#allocation3 + %s554]]
        %v556 = vstv %s555
        %v557 = vmul.f32 %v404, %v556
        %v558 = vmul.f32 %v405, %v556
        %v559 = vmul.f32 %v406, %v556
        %v563 = vrot.slane %v557, 4
        %v564 = vrot.slane %v558, 4
        %v565 = vsel %vm544, %v563, %v564
        %v566 = vrot.slane %v559, 4
        %v567 = vsel %vm544, %v564, %v566
        %v570 = vadd.f32 %v533, %v565
        %v571 = vadd.f32 %v534, %v567
        %s572 = sadd.s32 %s407, 35
        %s573 = sld [smem:[#allocation3 + %s572]]
        %v574 = vstv %s573
        %v575 = vmul.f32 %v401, %v574
        %v576 = vmul.f32 %v402, %v574
        %v577 = vmul.f32 %v403, %v574
        %vm581 = vcmask 1042432
        %v582 = vrot.slane %v575, 5
        %v583 = vrot.slane %v576, 5
        %v584 = vsel %vm581, %v582, %v583
        %v585 = vrot.slane %v577, 5
        %v586 = vsel %vm581, %v583, %v585
        %v589 = vadd.f32 %v552, %v584
        %v590 = vadd.f32 %v553, %v586
        %s591 = sadd.s32 %s407, 84
        %s592 = sld [smem:[#allocation3 + %s591]]
        %v593 = vstv %s592
        %v594 = vmul.f32 %v404, %v593
        %v595 = vmul.f32 %v405, %v593
        %v596 = vmul.f32 %v406, %v593
        %v600 = vrot.slane %v594, 5
        %v601 = vrot.slane %v595, 5
        %v602 = vsel %vm581, %v600, %v601
        %v603 = vrot.slane %v596, 5
        %v604 = vsel %vm581, %v601, %v603
        %v607 = vadd.f32 %v570, %v602
        %v608 = vadd.f32 %v571, %v604
        %s609 = sadd.s32 %s407, 42
        %s610 = sld [smem:[#allocation3 + %s609]]
        %v611 = vstv %s610
        %v612 = vmul.f32 %v401, %v611
        %v613 = vmul.f32 %v402, %v611
        %v614 = vmul.f32 %v403, %v611
        %vm618 = vcmask 1041408
        %v619 = vrot.slane %v612, 6
        %v620 = vrot.slane %v613, 6
        %v621 = vsel %vm618, %v619, %v620
        %v622 = vrot.slane %v614, 6
        %v623 = vsel %vm618, %v620, %v622
        %v626 = vadd.f32 %v589, %v621
        %v627 = vadd.f32 %v590, %v623
        %s628 = sadd.s32 %s407, 91
        %s629 = sld [smem:[#allocation3 + %s628]]
        %v630 = vstv %s629
        %v631 = vmul.f32 %v404, %v630
        %v632 = vmul.f32 %v405, %v630
        %v633 = vmul.f32 %v406, %v630
        %v637 = vrot.slane %v631, 6
        %v638 = vrot.slane %v632, 6
        %v639 = vsel %vm618, %v637, %v638
        %v640 = vrot.slane %v633, 6
        %v641 = vsel %vm618, %v638, %v640
        %v644 = vadd.f32 %v607, %v639
        %v645 = vadd.f32 %v608, %v641
        %s646 = sadd.s32 %s407, 1
        %s647 = sld [smem:[#allocation3 + %s646]]
        %v648 = vstv %s647
        %v649 = vmul.f32 %v401, %v648
        %v650 = vmul.f32 %v402, %v648
        %653 = vrot.lane.b32.xlu0 %v649, 127
        %v654 = vpop.permute.xlu0 %653
        %655 = vrot.lane.b32.xlu0 %v650, 127
        %v656 = vpop.permute.xlu0 %655
        %v659 = vadd.f32 %v626, %v654
        %v660 = vadd.f32 %v627, %v656
        %s661 = sadd.s32 %s407, 50
        %s662 = sld [smem:[#allocation3 + %s661]]
        %v663 = vstv %s662
        %v664 = vmul.f32 %v404, %v663
        %v665 = vmul.f32 %v405, %v663
        %668 = vrot.lane.b32.xlu0 %v664, 127
        %v669 = vpop.permute.xlu0 %668
        %670 = vrot.lane.b32.xlu0 %v665, 127
        %v671 = vpop.permute.xlu0 %670
        %v674 = vadd.f32 %v644, %v669
        %v675 = vadd.f32 %v645, %v671
        %s676 = sadd.s32 %s407, 8
        %s677 = sld [smem:[#allocation3 + %s676]]
        %v678 = vstv %s677
        %v679 = vmul.f32 %v401, %v678
        %v680 = vmul.f32 %v402, %v678
        %v681 = vmul.f32 %v403, %v678
        %v685 = vrot.slane %v679, 1
        %v686 = vrot.slane %v680, 1
        %v687 = vsel %vm433, %v685, %v686
        %v688 = vrot.slane %v681, 1
        %v689 = vsel %vm433, %v686, %v688
        %690 = vrot.lane.b32.xlu0 %v687, 127
        %v691 = vpop.permute.xlu0 %690
        %692 = vrot.lane.b32.xlu0 %v689, 127
        %v693 = vpop.permute.xlu0 %692
        %v696 = vadd.f32 %v659, %v691
        %v697 = vadd.f32 %v660, %v693
        %s698 = sadd.s32 %s407, 57
        %s699 = sld [smem:[#allocation3 + %s698]]
        %v700 = vstv %s699
        %v701 = vmul.f32 %v404, %v700
        %v702 = vmul.f32 %v405, %v700
        %v703 = vmul.f32 %v406, %v700
        %v707 = vrot.slane %v701, 1
        %v708 = vrot.slane %v702, 1
        %v709 = vsel %vm433, %v707, %v708
        %v710 = vrot.slane %v703, 1
        %v711 = vsel %vm433, %v708, %v710
        %712 = vrot.lane.b32.xlu0 %v709, 127
        %v713 = vpop.permute.xlu0 %712
        %714 = vrot.lane.b32.xlu0 %v711, 127
        %v715 = vpop.permute.xlu0 %714
        %v718 = vadd.f32 %v674, %v713
        %v719 = vadd.f32 %v675, %v715
        %s720 = sadd.s32 %s407, 15
        %s721 = sld [smem:[#allocation3 + %s720]]
        %v722 = vstv %s721
        %v723 = vmul.f32 %v401, %v722
        %v724 = vmul.f32 %v402, %v722
        %v725 = vmul.f32 %v403, %v722
        %v729 = vrot.slane %v723, 2
        %v730 = vrot.slane %v724, 2
        %v731 = vsel %vm470, %v729, %v730
        %v732 = vrot.slane %v725, 2
        %v733 = vsel %vm470, %v730, %v732
        %734 = vrot.lane.b32.xlu0 %v731, 127
        %v735 = vpop.permute.xlu0 %734
        %736 = vrot.lane.b32.xlu0 %v733, 127
        %v737 = vpop.permute.xlu0 %736
        %v740 = vadd.f32 %v696, %v735
        %v741 = vadd.f32 %v697, %v737
        %s742 = sadd.s32 %s407, 64
        %s743 = sld [smem:[#allocation3 + %s742]]
        %v744 = vstv %s743
        %v745 = vmul.f32 %v404, %v744
        %v746 = vmul.f32 %v405, %v744
        %v747 = vmul.f32 %v406, %v744
        %v751 = vrot.slane %v745, 2
        %v752 = vrot.slane %v746, 2
        %v753 = vsel %vm470, %v751, %v752
        %v754 = vrot.slane %v747, 2
        %v755 = vsel %vm470, %v752, %v754
        %756 = vrot.lane.b32.xlu0 %v753, 127
        %v757 = vpop.permute.xlu0 %756
        %758 = vrot.lane.b32.xlu0 %v755, 127
        %v759 = vpop.permute.xlu0 %758
        %v762 = vadd.f32 %v718, %v757
        %v763 = vadd.f32 %v719, %v759
        %s764 = sadd.s32 %s407, 22
        %s765 = sld [smem:[#allocation3 + %s764]]
        %v766 = vstv %s765
        %v767 = vmul.f32 %v401, %v766
        %v768 = vmul.f32 %v402, %v766
        %v769 = vmul.f32 %v403, %v766
        %v773 = vrot.slane %v767, 3
        %v774 = vrot.slane %v768, 3
        %v775 = vsel %vm507, %v773, %v774
        %v776 = vrot.slane %v769, 3
        %v777 = vsel %vm507, %v774, %v776
        %778 = vrot.lane.b32.xlu0 %v775, 127
        %v779 = vpop.permute.xlu0 %778
        %780 = vrot.lane.b32.xlu0 %v777, 127
        %v781 = vpop.permute.xlu0 %780
        %v784 = vadd.f32 %v740, %v779
        %v785 = vadd.f32 %v741, %v781
        %s786 = sadd.s32 %s407, 71
        %s787 = sld [smem:[#allocation3 + %s786]]
        %v788 = vstv %s787
        %v789 = vmul.f32 %v404, %v788
        %v790 = vmul.f32 %v405, %v788
        %v791 = vmul.f32 %v406, %v788
        %v795 = vrot.slane %v789, 3
        %v796 = vrot.slane %v790, 3
        %v797 = vsel %vm507, %v795, %v796
        %v798 = vrot.slane %v791, 3
        %v799 = vsel %vm507, %v796, %v798
        %800 = vrot.lane.b32.xlu0 %v797, 127
        %v801 = vpop.permute.xlu0 %800
        %802 = vrot.lane.b32.xlu0 %v799, 127
        %v803 = vpop.permute.xlu0 %802
        %v806 = vadd.f32 %v762, %v801
        %v807 = vadd.f32 %v763, %v803
        %s808 = sadd.s32 %s407, 29
        %s809 = sld [smem:[#allocation3 + %s808]]
        %v810 = vstv %s809
        %v811 = vmul.f32 %v401, %v810
        %v812 = vmul.f32 %v402, %v810
        %v813 = vmul.f32 %v403, %v810
        %v817 = vrot.slane %v811, 4
        %v818 = vrot.slane %v812, 4
        %v819 = vsel %vm544, %v817, %v818
        %v820 = vrot.slane %v813, 4
        %v821 = vsel %vm544, %v818, %v820
        %822 = vrot.lane.b32.xlu0 %v819, 127
        %v823 = vpop.permute.xlu0 %822
        %824 = vrot.lane.b32.xlu0 %v821, 127
        %v825 = vpop.permute.xlu0 %824
        %v828 = vadd.f32 %v784, %v823
        %v829 = vadd.f32 %v785, %v825
        %s830 = sadd.s32 %s407, 78
        %s831 = sld [smem:[#allocation3 + %s830]]
        %v832 = vstv %s831
        %v833 = vmul.f32 %v404, %v832
        %v834 = vmul.f32 %v405, %v832
        %v835 = vmul.f32 %v406, %v832
        %v839 = vrot.slane %v833, 4
        %v840 = vrot.slane %v834, 4
        %v841 = vsel %vm544, %v839, %v840
        %v842 = vrot.slane %v835, 4
        %v843 = vsel %vm544, %v840, %v842
        %844 = vrot.lane.b32.xlu0 %v841, 127
        %v845 = vpop.permute.xlu0 %844
        %846 = vrot.lane.b32.xlu0 %v843, 127
        %v847 = vpop.permute.xlu0 %846
        %v850 = vadd.f32 %v806, %v845
        %v851 = vadd.f32 %v807, %v847
        %s852 = sadd.s32 %s407, 36
        %s853 = sld [smem:[#allocation3 + %s852]]
        %v854 = vstv %s853
        %v855 = vmul.f32 %v401, %v854
        %v856 = vmul.f32 %v402, %v854
        %v857 = vmul.f32 %v403, %v854
        %v861 = vrot.slane %v855, 5
        %v862 = vrot.slane %v856, 5
        %v863 = vsel %vm581, %v861, %v862
        %v864 = vrot.slane %v857, 5
        %v865 = vsel %vm581, %v862, %v864
        %866 = vrot.lane.b32.xlu0 %v863, 127
        %v867 = vpop.permute.xlu0 %866
        %868 = vrot.lane.b32.xlu0 %v865, 127
        %v869 = vpop.permute.xlu0 %868
        %v872 = vadd.f32 %v828, %v867
        %v873 = vadd.f32 %v829, %v869
        %s874 = sadd.s32 %s407, 85
        %s875 = sld [smem:[#allocation3 + %s874]]
        %v876 = vstv %s875
        %v877 = vmul.f32 %v404, %v876
        %v878 = vmul.f32 %v405, %v876
        %v879 = vmul.f32 %v406, %v876
        %v883 = vrot.slane %v877, 5
        %v884 = vrot.slane %v878, 5
        %v885 = vsel %vm581, %v883, %v884
        %v886 = vrot.slane %v879, 5
        %v887 = vsel %vm581, %v884, %v886
        %888 = vrot.lane.b32.xlu0 %v885, 127
        %v889 = vpop.permute.xlu0 %888
        %890 = vrot.lane.b32.xlu0 %v887, 127
        %v891 = vpop.permute.xlu0 %890
        %v894 = vadd.f32 %v850, %v889
        %v895 = vadd.f32 %v851, %v891
        %s896 = sadd.s32 %s407, 43
        %s897 = sld [smem:[#allocation3 + %s896]]
        %v898 = vstv %s897
        %v899 = vmul.f32 %v401, %v898
        %v900 = vmul.f32 %v402, %v898
        %v901 = vmul.f32 %v403, %v898
        %v905 = vrot.slane %v899, 6
        %v906 = vrot.slane %v900, 6
        %v907 = vsel %vm618, %v905, %v906
        %v908 = vrot.slane %v901, 6
        %v909 = vsel %vm618, %v906, %v908
        %910 = vrot.lane.b32.xlu0 %v907, 127
        %v911 = vpop.permute.xlu0 %910
        %912 = vrot.lane.b32.xlu0 %v909, 127
        %v913 = vpop.permute.xlu0 %912
        %v916 = vadd.f32 %v872, %v911
        %v917 = vadd.f32 %v873, %v913
        %s918 = sadd.s32 %s407, 92
        %s919 = sld [smem:[#allocation3 + %s918]]
        %v920 = vstv %s919
        %v921 = vmul.f32 %v404, %v920
        %v922 = vmul.f32 %v405, %v920
        %v923 = vmul.f32 %v406, %v920
        %v927 = vrot.slane %v921, 6
        %v928 = vrot.slane %v922, 6
        %v929 = vsel %vm618, %v927, %v928
        %v930 = vrot.slane %v923, 6
        %v931 = vsel %vm618, %v928, %v930
        %932 = vrot.lane.b32.xlu0 %v929, 127
        %v933 = vpop.permute.xlu0 %932
        %934 = vrot.lane.b32.xlu0 %v931, 127
        %v935 = vpop.permute.xlu0 %934
        %v938 = vadd.f32 %v894, %v933
        %v939 = vadd.f32 %v895, %v935
        %s940 = sadd.s32 %s407, 2
        %s941 = sld [smem:[#allocation3 + %s940]]
        %v942 = vstv %s941
        %v943 = vmul.f32 %v401, %v942
        %v944 = vmul.f32 %v402, %v942
        %947 = vrot.lane.b32.xlu0 %v943, 126
        %v948 = vpop.permute.xlu0 %947
        %949 = vrot.lane.b32.xlu0 %v944, 126
        %v950 = vpop.permute.xlu0 %949
        %v953 = vadd.f32 %v916, %v948
        %v954 = vadd.f32 %v917, %v950
        %s955 = sadd.s32 %s407, 51
        %s956 = sld [smem:[#allocation3 + %s955]]
        %v957 = vstv %s956
        %v958 = vmul.f32 %v404, %v957
        %v959 = vmul.f32 %v405, %v957
        %962 = vrot.lane.b32.xlu0 %v958, 126
        %v963 = vpop.permute.xlu0 %962
        %964 = vrot.lane.b32.xlu0 %v959, 126
        %v965 = vpop.permute.xlu0 %964
        %v968 = vadd.f32 %v938, %v963
        %v969 = vadd.f32 %v939, %v965
        %s970 = sadd.s32 %s407, 9
        %s971 = sld [smem:[#allocation3 + %s970]]
        %v972 = vstv %s971
        %v973 = vmul.f32 %v401, %v972
        %v974 = vmul.f32 %v402, %v972
        %v975 = vmul.f32 %v403, %v972
        %v979 = vrot.slane %v973, 1
        %v980 = vrot.slane %v974, 1
        %v981 = vsel %vm433, %v979, %v980
        %v982 = vrot.slane %v975, 1
        %v983 = vsel %vm433, %v980, %v982
        %984 = vrot.lane.b32.xlu0 %v981, 126
        %v985 = vpop.permute.xlu0 %984
        %986 = vrot.lane.b32.xlu0 %v983, 126
        %v987 = vpop.permute.xlu0 %986
        %v990 = vadd.f32 %v953, %v985
        %v991 = vadd.f32 %v954, %v987
        %s992 = sadd.s32 %s407, 58
        %s993 = sld [smem:[#allocation3 + %s992]]
        %v994 = vstv %s993
        %v995 = vmul.f32 %v404, %v994
        %v996 = vmul.f32 %v405, %v994
        %v997 = vmul.f32 %v406, %v994
        %v1001 = vrot.slane %v995, 1
        %v1002 = vrot.slane %v996, 1
        %v1003 = vsel %vm433, %v1001, %v1002
        %v1004 = vrot.slane %v997, 1
        %v1005 = vsel %vm433, %v1002, %v1004
        %1006 = vrot.lane.b32.xlu0 %v1003, 126
        %v1007 = vpop.permute.xlu0 %1006
        %1008 = vrot.lane.b32.xlu0 %v1005, 126
        %v1009 = vpop.permute.xlu0 %1008
        %v1012 = vadd.f32 %v968, %v1007
        %v1013 = vadd.f32 %v969, %v1009
        %s1014 = sadd.s32 %s407, 16
        %s1015 = sld [smem:[#allocation3 + %s1014]]
        %v1016 = vstv %s1015
        %v1017 = vmul.f32 %v401, %v1016
        %v1018 = vmul.f32 %v402, %v1016
        %v1019 = vmul.f32 %v403, %v1016
        %v1023 = vrot.slane %v1017, 2
        %v1024 = vrot.slane %v1018, 2
        %v1025 = vsel %vm470, %v1023, %v1024
        %v1026 = vrot.slane %v1019, 2
        %v1027 = vsel %vm470, %v1024, %v1026
        %1028 = vrot.lane.b32.xlu0 %v1025, 126
        %v1029 = vpop.permute.xlu0 %1028
        %1030 = vrot.lane.b32.xlu0 %v1027, 126
        %v1031 = vpop.permute.xlu0 %1030
        %v1034 = vadd.f32 %v990, %v1029
        %v1035 = vadd.f32 %v991, %v1031
        %s1036 = sadd.s32 %s407, 65
        %s1037 = sld [smem:[#allocation3 + %s1036]]
        %v1038 = vstv %s1037
        %v1039 = vmul.f32 %v404, %v1038
        %v1040 = vmul.f32 %v405, %v1038
        %v1041 = vmul.f32 %v406, %v1038
        %v1045 = vrot.slane %v1039, 2
        %v1046 = vrot.slane %v1040, 2
        %v1047 = vsel %vm470, %v1045, %v1046
        %v1048 = vrot.slane %v1041, 2
        %v1049 = vsel %vm470, %v1046, %v1048
        %1050 = vrot.lane.b32.xlu0 %v1047, 126
        %v1051 = vpop.permute.xlu0 %1050
        %1052 = vrot.lane.b32.xlu0 %v1049, 126
        %v1053 = vpop.permute.xlu0 %1052
        %v1056 = vadd.f32 %v1012, %v1051
        %v1057 = vadd.f32 %v1013, %v1053
        %s1058 = sadd.s32 %s407, 23
        %s1059 = sld [smem:[#allocation3 + %s1058]]
        %v1060 = vstv %s1059
        %v1061 = vmul.f32 %v401, %v1060
        %v1062 = vmul.f32 %v402, %v1060
        %v1063 = vmul.f32 %v403, %v1060
        %v1067 = vrot.slane %v1061, 3
        %v1068 = vrot.slane %v1062, 3
        %v1069 = vsel %vm507, %v1067, %v1068
        %v1070 = vrot.slane %v1063, 3
        %v1071 = vsel %vm507, %v1068, %v1070
        %1072 = vrot.lane.b32.xlu0 %v1069, 126
        %v1073 = vpop.permute.xlu0 %1072
        %1074 = vrot.lane.b32.xlu0 %v1071, 126
        %v1075 = vpop.permute.xlu0 %1074
        %v1078 = vadd.f32 %v1034, %v1073
        %v1079 = vadd.f32 %v1035, %v1075
        %s1080 = sadd.s32 %s407, 72
        %s1081 = sld [smem:[#allocation3 + %s1080]]
        %v1082 = vstv %s1081
        %v1083 = vmul.f32 %v404, %v1082
        %v1084 = vmul.f32 %v405, %v1082
        %v1085 = vmul.f32 %v406, %v1082
        %v1089 = vrot.slane %v1083, 3
        %v1090 = vrot.slane %v1084, 3
        %v1091 = vsel %vm507, %v1089, %v1090
        %v1092 = vrot.slane %v1085, 3
        %v1093 = vsel %vm507, %v1090, %v1092
        %1094 = vrot.lane.b32.xlu0 %v1091, 126
        %v1095 = vpop.permute.xlu0 %1094
        %1096 = vrot.lane.b32.xlu0 %v1093, 126
        %v1097 = vpop.permute.xlu0 %1096
        %v1100 = vadd.f32 %v1056, %v1095
        %v1101 = vadd.f32 %v1057, %v1097
        %s1102 = sadd.s32 %s407, 30
        %s1103 = sld [smem:[#allocation3 + %s1102]]
        %v1104 = vstv %s1103
        %v1105 = vmul.f32 %v401, %v1104
        %v1106 = vmul.f32 %v402, %v1104
        %v1107 = vmul.f32 %v403, %v1104
        %v1111 = vrot.slane %v1105, 4
        %v1112 = vrot.slane %v1106, 4
        %v1113 = vsel %vm544, %v1111, %v1112
        %v1114 = vrot.slane %v1107, 4
        %v1115 = vsel %vm544, %v1112, %v1114
        %1116 = vrot.lane.b32.xlu0 %v1113, 126
        %v1117 = vpop.permute.xlu0 %1116
        %1118 = vrot.lane.b32.xlu0 %v1115, 126
        %v1119 = vpop.permute.xlu0 %1118
        %v1122 = vadd.f32 %v1078, %v1117
        %v1123 = vadd.f32 %v1079, %v1119
        %s1124 = sadd.s32 %s407, 79
        %s1125 = sld [smem:[#allocation3 + %s1124]]
        %v1126 = vstv %s1125
        %v1127 = vmul.f32 %v404, %v1126
        %v1128 = vmul.f32 %v405, %v1126
        %v1129 = vmul.f32 %v406, %v1126
        %v1133 = vrot.slane %v1127, 4
        %v1134 = vrot.slane %v1128, 4
        %v1135 = vsel %vm544, %v1133, %v1134
        %v1136 = vrot.slane %v1129, 4
        %v1137 = vsel %vm544, %v1134, %v1136
        %1138 = vrot.lane.b32.xlu0 %v1135, 126
        %v1139 = vpop.permute.xlu0 %1138
        %1140 = vrot.lane.b32.xlu0 %v1137, 126
        %v1141 = vpop.permute.xlu0 %1140
        %v1144 = vadd.f32 %v1100, %v1139
        %v1145 = vadd.f32 %v1101, %v1141
        %s1146 = sadd.s32 %s407, 37
        %s1147 = sld [smem:[#allocation3 + %s1146]]
        %v1148 = vstv %s1147
        %v1149 = vmul.f32 %v401, %v1148
        %v1150 = vmul.f32 %v402, %v1148
        %v1151 = vmul.f32 %v403, %v1148
        %v1155 = vrot.slane %v1149, 5
        %v1156 = vrot.slane %v1150, 5
        %v1157 = vsel %vm581, %v1155, %v1156
        %v1158 = vrot.slane %v1151, 5
        %v1159 = vsel %vm581, %v1156, %v1158
        %1160 = vrot.lane.b32.xlu0 %v1157, 126
        %v1161 = vpop.permute.xlu0 %1160
        %1162 = vrot.lane.b32.xlu0 %v1159, 126
        %v1163 = vpop.permute.xlu0 %1162
        %v1166 = vadd.f32 %v1122, %v1161
        %v1167 = vadd.f32 %v1123, %v1163
        %s1168 = sadd.s32 %s407, 86
        %s1169 = sld [smem:[#allocation3 + %s1168]]
        %v1170 = vstv %s1169
        %v1171 = vmul.f32 %v404, %v1170
        %v1172 = vmul.f32 %v405, %v1170
        %v1173 = vmul.f32 %v406, %v1170
        %v1177 = vrot.slane %v1171, 5
        %v1178 = vrot.slane %v1172, 5
        %v1179 = vsel %vm581, %v1177, %v1178
        %v1180 = vrot.slane %v1173, 5
        %v1181 = vsel %vm581, %v1178, %v1180
        %1182 = vrot.lane.b32.xlu0 %v1179, 126
        %v1183 = vpop.permute.xlu0 %1182
        %1184 = vrot.lane.b32.xlu0 %v1181, 126
        %v1185 = vpop.permute.xlu0 %1184
        %v1188 = vadd.f32 %v1144, %v1183
        %v1189 = vadd.f32 %v1145, %v1185
        %s1190 = sadd.s32 %s407, 44
        %s1191 = sld [smem:[#allocation3 + %s1190]]
        %v1192 = vstv %s1191
        %v1193 = vmul.f32 %v401, %v1192
        %v1194 = vmul.f32 %v402, %v1192
        %v1195 = vmul.f32 %v403, %v1192
        %v1199 = vrot.slane %v1193, 6
        %v1200 = vrot.slane %v1194, 6
        %v1201 = vsel %vm618, %v1199, %v1200
        %v1202 = vrot.slane %v1195, 6
        %v1203 = vsel %vm618, %v1200, %v1202
        %1204 = vrot.lane.b32.xlu0 %v1201, 126
        %v1205 = vpop.permute.xlu0 %1204
        %1206 = vrot.lane.b32.xlu0 %v1203, 126
        %v1207 = vpop.permute.xlu0 %1206
        %v1210 = vadd.f32 %v1166, %v1205
        %v1211 = vadd.f32 %v1167, %v1207
        %s1212 = sadd.s32 %s407, 93
        %s1213 = sld [smem:[#allocation3 + %s1212]]
        %v1214 = vstv %s1213
        %v1215 = vmul.f32 %v404, %v1214
        %v1216 = vmul.f32 %v405, %v1214
        %v1217 = vmul.f32 %v406, %v1214
        %v1221 = vrot.slane %v1215, 6
        %v1222 = vrot.slane %v1216, 6
        %v1223 = vsel %vm618, %v1221, %v1222
        %v1224 = vrot.slane %v1217, 6
        %v1225 = vsel %vm618, %v1222, %v1224
        %1226 = vrot.lane.b32.xlu0 %v1223, 126
        %v1227 = vpop.permute.xlu0 %1226
        %1228 = vrot.lane.b32.xlu0 %v1225, 126
        %v1229 = vpop.permute.xlu0 %1228
        %v1232 = vadd.f32 %v1188, %v1227
        %v1233 = vadd.f32 %v1189, %v1229
        %s1234 = sadd.s32 %s407, 3
        %s1235 = sld [smem:[#allocation3 + %s1234]]
        %v1236 = vstv %s1235
        %v1237 = vmul.f32 %v401, %v1236
        %v1238 = vmul.f32 %v402, %v1236
        %1241 = vrot.lane.b32.xlu0 %v1237, 125
        %v1242 = vpop.permute.xlu0 %1241
        %1243 = vrot.lane.b32.xlu0 %v1238, 125
        %v1244 = vpop.permute.xlu0 %1243
        %v1247 = vadd.f32 %v1210, %v1242
        %v1248 = vadd.f32 %v1211, %v1244
        %s1249 = sadd.s32 %s407, 52
        %s1250 = sld [smem:[#allocation3 + %s1249]]
        %v1251 = vstv %s1250
        %v1252 = vmul.f32 %v404, %v1251
        %v1253 = vmul.f32 %v405, %v1251
        %1256 = vrot.lane.b32.xlu0 %v1252, 125
        %v1257 = vpop.permute.xlu0 %1256
        %1258 = vrot.lane.b32.xlu0 %v1253, 125
        %v1259 = vpop.permute.xlu0 %1258
        %v1262 = vadd.f32 %v1232, %v1257
        %v1263 = vadd.f32 %v1233, %v1259
        %s1264 = sadd.s32 %s407, 10
        %s1265 = sld [smem:[#allocation3 + %s1264]]
        %v1266 = vstv %s1265
        %v1267 = vmul.f32 %v401, %v1266
        %v1268 = vmul.f32 %v402, %v1266
        %v1269 = vmul.f32 %v403, %v1266
        %v1273 = vrot.slane %v1267, 1
        %v1274 = vrot.slane %v1268, 1
        %v1275 = vsel %vm433, %v1273, %v1274
        %v1276 = vrot.slane %v1269, 1
        %v1277 = vsel %vm433, %v1274, %v1276
        %1278 = vrot.lane.b32.xlu0 %v1275, 125
        %v1279 = vpop.permute.xlu0 %1278
        %1280 = vrot.lane.b32.xlu0 %v1277, 125
        %v1281 = vpop.permute.xlu0 %1280
        %v1284 = vadd.f32 %v1247, %v1279
        %v1285 = vadd.f32 %v1248, %v1281
        %s1286 = sadd.s32 %s407, 59
        %s1287 = sld [smem:[#allocation3 + %s1286]]
        %v1288 = vstv %s1287
        %v1289 = vmul.f32 %v404, %v1288
        %v1290 = vmul.f32 %v405, %v1288
        %v1291 = vmul.f32 %v406, %v1288
        %v1295 = vrot.slane %v1289, 1
        %v1296 = vrot.slane %v1290, 1
        %v1297 = vsel %vm433, %v1295, %v1296
        %v1298 = vrot.slane %v1291, 1
        %v1299 = vsel %vm433, %v1296, %v1298
        %1300 = vrot.lane.b32.xlu0 %v1297, 125
        %v1301 = vpop.permute.xlu0 %1300
        %1302 = vrot.lane.b32.xlu0 %v1299, 125
        %v1303 = vpop.permute.xlu0 %1302
        %v1306 = vadd.f32 %v1262, %v1301
        %v1307 = vadd.f32 %v1263, %v1303
        %s1308 = sadd.s32 %s407, 17
        %s1309 = sld [smem:[#allocation3 + %s1308]]
        %v1310 = vstv %s1309
        %v1311 = vmul.f32 %v401, %v1310
        %v1312 = vmul.f32 %v402, %v1310
        %v1313 = vmul.f32 %v403, %v1310
        %v1317 = vrot.slane %v1311, 2
        %v1318 = vrot.slane %v1312, 2
        %v1319 = vsel %vm470, %v1317, %v1318
        %v1320 = vrot.slane %v1313, 2
        %v1321 = vsel %vm470, %v1318, %v1320
        %1322 = vrot.lane.b32.xlu0 %v1319, 125
        %v1323 = vpop.permute.xlu0 %1322
        %1324 = vrot.lane.b32.xlu0 %v1321, 125
        %v1325 = vpop.permute.xlu0 %1324
        %v1328 = vadd.f32 %v1284, %v1323
        %v1329 = vadd.f32 %v1285, %v1325
        %s1330 = sadd.s32 %s407, 66
        %s1331 = sld [smem:[#allocation3 + %s1330]]
        %v1332 = vstv %s1331
        %v1333 = vmul.f32 %v404, %v1332
        %v1334 = vmul.f32 %v405, %v1332
        %v1335 = vmul.f32 %v406, %v1332
        %v1339 = vrot.slane %v1333, 2
        %v1340 = vrot.slane %v1334, 2
        %v1341 = vsel %vm470, %v1339, %v1340
        %v1342 = vrot.slane %v1335, 2
        %v1343 = vsel %vm470, %v1340, %v1342
        %1344 = vrot.lane.b32.xlu0 %v1341, 125
        %v1345 = vpop.permute.xlu0 %1344
        %1346 = vrot.lane.b32.xlu0 %v1343, 125
        %v1347 = vpop.permute.xlu0 %1346
        %v1350 = vadd.f32 %v1306, %v1345
        %v1351 = vadd.f32 %v1307, %v1347
        %s1352 = sadd.s32 %s407, 24
        %s1353 = sld [smem:[#allocation3 + %s1352]]
        %v1354 = vstv %s1353
        %v1355 = vmul.f32 %v401, %v1354
        %v1356 = vmul.f32 %v402, %v1354
        %v1357 = vmul.f32 %v403, %v1354
        %v1361 = vrot.slane %v1355, 3
        %v1362 = vrot.slane %v1356, 3
        %v1363 = vsel %vm507, %v1361, %v1362
        %v1364 = vrot.slane %v1357, 3
        %v1365 = vsel %vm507, %v1362, %v1364
        %1366 = vrot.lane.b32.xlu0 %v1363, 125
        %v1367 = vpop.permute.xlu0 %1366
        %1368 = vrot.lane.b32.xlu0 %v1365, 125
        %v1369 = vpop.permute.xlu0 %1368
        %v1372 = vadd.f32 %v1328, %v1367
        %v1373 = vadd.f32 %v1329, %v1369
        %s1374 = sadd.s32 %s407, 73
        %s1375 = sld [smem:[#allocation3 + %s1374]]
        %v1376 = vstv %s1375
        %v1377 = vmul.f32 %v404, %v1376
        %v1378 = vmul.f32 %v405, %v1376
        %v1379 = vmul.f32 %v406, %v1376
        %v1383 = vrot.slane %v1377, 3
        %v1384 = vrot.slane %v1378, 3
        %v1385 = vsel %vm507, %v1383, %v1384
        %v1386 = vrot.slane %v1379, 3
        %v1387 = vsel %vm507, %v1384, %v1386
        %1388 = vrot.lane.b32.xlu0 %v1385, 125
        %v1389 = vpop.permute.xlu0 %1388
        %1390 = vrot.lane.b32.xlu0 %v1387, 125
        %v1391 = vpop.permute.xlu0 %1390
        %v1394 = vadd.f32 %v1350, %v1389
        %v1395 = vadd.f32 %v1351, %v1391
        %s1396 = sadd.s32 %s407, 31
        %s1397 = sld [smem:[#allocation3 + %s1396]]
        %v1398 = vstv %s1397
        %v1399 = vmul.f32 %v401, %v1398
        %v1400 = vmul.f32 %v402, %v1398
        %v1401 = vmul.f32 %v403, %v1398
        %v1405 = vrot.slane %v1399, 4
        %v1406 = vrot.slane %v1400, 4
        %v1407 = vsel %vm544, %v1405, %v1406
        %v1408 = vrot.slane %v1401, 4
        %v1409 = vsel %vm544, %v1406, %v1408
        %1410 = vrot.lane.b32.xlu0 %v1407, 125
        %v1411 = vpop.permute.xlu0 %1410
        %1412 = vrot.lane.b32.xlu0 %v1409, 125
        %v1413 = vpop.permute.xlu0 %1412
        %v1416 = vadd.f32 %v1372, %v1411
        %v1417 = vadd.f32 %v1373, %v1413
        %s1418 = sadd.s32 %s407, 80
        %s1419 = sld [smem:[#allocation3 + %s1418]]
        %v1420 = vstv %s1419
        %v1421 = vmul.f32 %v404, %v1420
        %v1422 = vmul.f32 %v405, %v1420
        %v1423 = vmul.f32 %v406, %v1420
        %v1427 = vrot.slane %v1421, 4
        %v1428 = vrot.slane %v1422, 4
        %v1429 = vsel %vm544, %v1427, %v1428
        %v1430 = vrot.slane %v1423, 4
        %v1431 = vsel %vm544, %v1428, %v1430
        %1432 = vrot.lane.b32.xlu0 %v1429, 125
        %v1433 = vpop.permute.xlu0 %1432
        %1434 = vrot.lane.b32.xlu0 %v1431, 125
        %v1435 = vpop.permute.xlu0 %1434
        %v1438 = vadd.f32 %v1394, %v1433
        %v1439 = vadd.f32 %v1395, %v1435
        %s1440 = sadd.s32 %s407, 38
        %s1441 = sld [smem:[#allocation3 + %s1440]]
        %v1442 = vstv %s1441
        %v1443 = vmul.f32 %v401, %v1442
        %v1444 = vmul.f32 %v402, %v1442
        %v1445 = vmul.f32 %v403, %v1442
        %v1449 = vrot.slane %v1443, 5
        %v1450 = vrot.slane %v1444, 5
        %v1451 = vsel %vm581, %v1449, %v1450
        %v1452 = vrot.slane %v1445, 5
        %v1453 = vsel %vm581, %v1450, %v1452
        %1454 = vrot.lane.b32.xlu0 %v1451, 125
        %v1455 = vpop.permute.xlu0 %1454
        %1456 = vrot.lane.b32.xlu0 %v1453, 125
        %v1457 = vpop.permute.xlu0 %1456
        %v1460 = vadd.f32 %v1416, %v1455
        %v1461 = vadd.f32 %v1417, %v1457
        %s1462 = sadd.s32 %s407, 87
        %s1463 = sld [smem:[#allocation3 + %s1462]]
        %v1464 = vstv %s1463
        %v1465 = vmul.f32 %v404, %v1464
        %v1466 = vmul.f32 %v405, %v1464
        %v1467 = vmul.f32 %v406, %v1464
        %v1471 = vrot.slane %v1465, 5
        %v1472 = vrot.slane %v1466, 5
        %v1473 = vsel %vm581, %v1471, %v1472
        %v1474 = vrot.slane %v1467, 5
        %v1475 = vsel %vm581, %v1472, %v1474
        %1476 = vrot.lane.b32.xlu0 %v1473, 125
        %v1477 = vpop.permute.xlu0 %1476
        %1478 = vrot.lane.b32.xlu0 %v1475, 125
        %v1479 = vpop.permute.xlu0 %1478
        %v1482 = vadd.f32 %v1438, %v1477
        %v1483 = vadd.f32 %v1439, %v1479
        %s1484 = sadd.s32 %s407, 45
        %s1485 = sld [smem:[#allocation3 + %s1484]]
        %v1486 = vstv %s1485
        %v1487 = vmul.f32 %v401, %v1486
        %v1488 = vmul.f32 %v402, %v1486
        %v1489 = vmul.f32 %v403, %v1486
        %v1493 = vrot.slane %v1487, 6
        %v1494 = vrot.slane %v1488, 6
        %v1495 = vsel %vm618, %v1493, %v1494
        %v1496 = vrot.slane %v1489, 6
        %v1497 = vsel %vm618, %v1494, %v1496
        %1498 = vrot.lane.b32.xlu0 %v1495, 125
        %v1499 = vpop.permute.xlu0 %1498
        %1500 = vrot.lane.b32.xlu0 %v1497, 125
        %v1501 = vpop.permute.xlu0 %1500
        %v1504 = vadd.f32 %v1460, %v1499
        %v1505 = vadd.f32 %v1461, %v1501
        %s1506 = sadd.s32 %s407, 94
        %s1507 = sld [smem:[#allocation3 + %s1506]]
        %v1508 = vstv %s1507
        %v1509 = vmul.f32 %v404, %v1508
        %v1510 = vmul.f32 %v405, %v1508
        %v1511 = vmul.f32 %v406, %v1508
        %v1515 = vrot.slane %v1509, 6
        %v1516 = vrot.slane %v1510, 6
        %v1517 = vsel %vm618, %v1515, %v1516
        %v1518 = vrot.slane %v1511, 6
        %v1519 = vsel %vm618, %v1516, %v1518
        %1520 = vrot.lane.b32.xlu0 %v1517, 125
        %v1521 = vpop.permute.xlu0 %1520
        %1522 = vrot.lane.b32.xlu0 %v1519, 125
        %v1523 = vpop.permute.xlu0 %1522
        %v1526 = vadd.f32 %v1482, %v1521
        %v1527 = vadd.f32 %v1483, %v1523
        %s1528 = sadd.s32 %s407, 4
        %s1529 = sld [smem:[#allocation3 + %s1528]]
        %v1530 = vstv %s1529
        %v1531 = vmul.f32 %v401, %v1530
        %v1532 = vmul.f32 %v402, %v1530
        %1535 = vrot.lane.b32.xlu0 %v1531, 124
        %v1536 = vpop.permute.xlu0 %1535
        %1537 = vrot.lane.b32.xlu0 %v1532, 124
        %v1538 = vpop.permute.xlu0 %1537
        %v1541 = vadd.f32 %v1504, %v1536
        %v1542 = vadd.f32 %v1505, %v1538
        %s1543 = sadd.s32 %s407, 53
        %s1544 = sld [smem:[#allocation3 + %s1543]]
        %v1545 = vstv %s1544
        %v1546 = vmul.f32 %v404, %v1545
        %v1547 = vmul.f32 %v405, %v1545
        %1550 = vrot.lane.b32.xlu0 %v1546, 124
        %v1551 = vpop.permute.xlu0 %1550
        %1552 = vrot.lane.b32.xlu0 %v1547, 124
        %v1553 = vpop.permute.xlu0 %1552
        %v1556 = vadd.f32 %v1526, %v1551
        %v1557 = vadd.f32 %v1527, %v1553
        %s1558 = sadd.s32 %s407, 11
        %s1559 = sld [smem:[#allocation3 + %s1558]]
        %v1560 = vstv %s1559
        %v1561 = vmul.f32 %v401, %v1560
        %v1562 = vmul.f32 %v402, %v1560
        %v1563 = vmul.f32 %v403, %v1560
        %v1567 = vrot.slane %v1561, 1
        %v1568 = vrot.slane %v1562, 1
        %v1569 = vsel %vm433, %v1567, %v1568
        %v1570 = vrot.slane %v1563, 1
        %v1571 = vsel %vm433, %v1568, %v1570
        %1572 = vrot.lane.b32.xlu0 %v1569, 124
        %v1573 = vpop.permute.xlu0 %1572
        %1574 = vrot.lane.b32.xlu0 %v1571, 124
        %v1575 = vpop.permute.xlu0 %1574
        %v1578 = vadd.f32 %v1541, %v1573
        %v1579 = vadd.f32 %v1542, %v1575
        %s1580 = sadd.s32 %s407, 60
        %s1581 = sld [smem:[#allocation3 + %s1580]]
        %v1582 = vstv %s1581
        %v1583 = vmul.f32 %v404, %v1582
        %v1584 = vmul.f32 %v405, %v1582
        %v1585 = vmul.f32 %v406, %v1582
        %v1589 = vrot.slane %v1583, 1
        %v1590 = vrot.slane %v1584, 1
        %v1591 = vsel %vm433, %v1589, %v1590
        %v1592 = vrot.slane %v1585, 1
        %v1593 = vsel %vm433, %v1590, %v1592
        %1594 = vrot.lane.b32.xlu0 %v1591, 124
        %v1595 = vpop.permute.xlu0 %1594
        %1596 = vrot.lane.b32.xlu0 %v1593, 124
        %v1597 = vpop.permute.xlu0 %1596
        %v1600 = vadd.f32 %v1556, %v1595
        %v1601 = vadd.f32 %v1557, %v1597
        %s1602 = sadd.s32 %s407, 18
        %s1603 = sld [smem:[#allocation3 + %s1602]]
        %v1604 = vstv %s1603
        %v1605 = vmul.f32 %v401, %v1604
        %v1606 = vmul.f32 %v402, %v1604
        %v1607 = vmul.f32 %v403, %v1604
        %v1611 = vrot.slane %v1605, 2
        %v1612 = vrot.slane %v1606, 2
        %v1613 = vsel %vm470, %v1611, %v1612
        %v1614 = vrot.slane %v1607, 2
        %v1615 = vsel %vm470, %v1612, %v1614
        %1616 = vrot.lane.b32.xlu0 %v1613, 124
        %v1617 = vpop.permute.xlu0 %1616
        %1618 = vrot.lane.b32.xlu0 %v1615, 124
        %v1619 = vpop.permute.xlu0 %1618
        %v1622 = vadd.f32 %v1578, %v1617
        %v1623 = vadd.f32 %v1579, %v1619
        %s1624 = sadd.s32 %s407, 67
        %s1625 = sld [smem:[#allocation3 + %s1624]]
        %v1626 = vstv %s1625
        %v1627 = vmul.f32 %v404, %v1626
        %v1628 = vmul.f32 %v405, %v1626
        %v1629 = vmul.f32 %v406, %v1626
        %v1633 = vrot.slane %v1627, 2
        %v1634 = vrot.slane %v1628, 2
        %v1635 = vsel %vm470, %v1633, %v1634
        %v1636 = vrot.slane %v1629, 2
        %v1637 = vsel %vm470, %v1634, %v1636
        %1638 = vrot.lane.b32.xlu0 %v1635, 124
        %v1639 = vpop.permute.xlu0 %1638
        %1640 = vrot.lane.b32.xlu0 %v1637, 124
        %v1641 = vpop.permute.xlu0 %1640
        %v1644 = vadd.f32 %v1600, %v1639
        %v1645 = vadd.f32 %v1601, %v1641
        %s1646 = sadd.s32 %s407, 25
        %s1647 = sld [smem:[#allocation3 + %s1646]]
        %v1648 = vstv %s1647
        %v1649 = vmul.f32 %v401, %v1648
        %v1650 = vmul.f32 %v402, %v1648
        %v1651 = vmul.f32 %v403, %v1648
        %v1655 = vrot.slane %v1649, 3
        %v1656 = vrot.slane %v1650, 3
        %v1657 = vsel %vm507, %v1655, %v1656
        %v1658 = vrot.slane %v1651, 3
        %v1659 = vsel %vm507, %v1656, %v1658
        %1660 = vrot.lane.b32.xlu0 %v1657, 124
        %v1661 = vpop.permute.xlu0 %1660
        %1662 = vrot.lane.b32.xlu0 %v1659, 124
        %v1663 = vpop.permute.xlu0 %1662
        %v1666 = vadd.f32 %v1622, %v1661
        %v1667 = vadd.f32 %v1623, %v1663
        %s1668 = sadd.s32 %s407, 74
        %s1669 = sld [smem:[#allocation3 + %s1668]]
        %v1670 = vstv %s1669
        %v1671 = vmul.f32 %v404, %v1670
        %v1672 = vmul.f32 %v405, %v1670
        %v1673 = vmul.f32 %v406, %v1670
        %v1677 = vrot.slane %v1671, 3
        %v1678 = vrot.slane %v1672, 3
        %v1679 = vsel %vm507, %v1677, %v1678
        %v1680 = vrot.slane %v1673, 3
        %v1681 = vsel %vm507, %v1678, %v1680
        %1682 = vrot.lane.b32.xlu0 %v1679, 124
        %v1683 = vpop.permute.xlu0 %1682
        %1684 = vrot.lane.b32.xlu0 %v1681, 124
        %v1685 = vpop.permute.xlu0 %1684
        %v1688 = vadd.f32 %v1644, %v1683
        %v1689 = vadd.f32 %v1645, %v1685
        %s1690 = sadd.s32 %s407, 32
        %s1691 = sld [smem:[#allocation3 + %s1690]]
        %v1692 = vstv %s1691
        %v1693 = vmul.f32 %v401, %v1692
        %v1694 = vmul.f32 %v402, %v1692
        %v1695 = vmul.f32 %v403, %v1692
        %v1699 = vrot.slane %v1693, 4
        %v1700 = vrot.slane %v1694, 4
        %v1701 = vsel %vm544, %v1699, %v1700
        %v1702 = vrot.slane %v1695, 4
        %v1703 = vsel %vm544, %v1700, %v1702
        %1704 = vrot.lane.b32.xlu0 %v1701, 124
        %v1705 = vpop.permute.xlu0 %1704
        %1706 = vrot.lane.b32.xlu0 %v1703, 124
        %v1707 = vpop.permute.xlu0 %1706
        %v1710 = vadd.f32 %v1666, %v1705
        %v1711 = vadd.f32 %v1667, %v1707
        %s1712 = sadd.s32 %s407, 81
        %s1713 = sld [smem:[#allocation3 + %s1712]]
        %v1714 = vstv %s1713
        %v1715 = vmul.f32 %v404, %v1714
        %v1716 = vmul.f32 %v405, %v1714
        %v1717 = vmul.f32 %v406, %v1714
        %v1721 = vrot.slane %v1715, 4
        %v1722 = vrot.slane %v1716, 4
        %v1723 = vsel %vm544, %v1721, %v1722
        %v1724 = vrot.slane %v1717, 4
        %v1725 = vsel %vm544, %v1722, %v1724
        %1726 = vrot.lane.b32.xlu0 %v1723, 124
        %v1727 = vpop.permute.xlu0 %1726
        %1728 = vrot.lane.b32.xlu0 %v1725, 124
        %v1729 = vpop.permute.xlu0 %1728
        %v1732 = vadd.f32 %v1688, %v1727
        %v1733 = vadd.f32 %v1689, %v1729
        %s1734 = sadd.s32 %s407, 39
        %s1735 = sld [smem:[#allocation3 + %s1734]]
        %v1736 = vstv %s1735
        %v1737 = vmul.f32 %v401, %v1736
        %v1738 = vmul.f32 %v402, %v1736
        %v1739 = vmul.f32 %v403, %v1736
        %v1743 = vrot.slane %v1737, 5
        %v1744 = vrot.slane %v1738, 5
        %v1745 = vsel %vm581, %v1743, %v1744
        %v1746 = vrot.slane %v1739, 5
        %v1747 = vsel %vm581, %v1744, %v1746
        %1748 = vrot.lane.b32.xlu0 %v1745, 124
        %v1749 = vpop.permute.xlu0 %1748
        %1750 = vrot.lane.b32.xlu0 %v1747, 124
        %v1751 = vpop.permute.xlu0 %1750
        %v1754 = vadd.f32 %v1710, %v1749
        %v1755 = vadd.f32 %v1711, %v1751
        %s1756 = sadd.s32 %s407, 88
        %s1757 = sld [smem:[#allocation3 + %s1756]]
        %v1758 = vstv %s1757
        %v1759 = vmul.f32 %v404, %v1758
        %v1760 = vmul.f32 %v405, %v1758
        %v1761 = vmul.f32 %v406, %v1758
        %v1765 = vrot.slane %v1759, 5
        %v1766 = vrot.slane %v1760, 5
        %v1767 = vsel %vm581, %v1765, %v1766
        %v1768 = vrot.slane %v1761, 5
        %v1769 = vsel %vm581, %v1766, %v1768
        %1770 = vrot.lane.b32.xlu0 %v1767, 124
        %v1771 = vpop.permute.xlu0 %1770
        %1772 = vrot.lane.b32.xlu0 %v1769, 124
        %v1773 = vpop.permute.xlu0 %1772
        %v1776 = vadd.f32 %v1732, %v1771
        %v1777 = vadd.f32 %v1733, %v1773
        %s1778 = sadd.s32 %s407, 46
        %s1779 = sld [smem:[#allocation3 + %s1778]]
        %v1780 = vstv %s1779
        %v1781 = vmul.f32 %v401, %v1780
        %v1782 = vmul.f32 %v402, %v1780
        %v1783 = vmul.f32 %v403, %v1780
        %v1787 = vrot.slane %v1781, 6
        %v1788 = vrot.slane %v1782, 6
        %v1789 = vsel %vm618, %v1787, %v1788
        %v1790 = vrot.slane %v1783, 6
        %v1791 = vsel %vm618, %v1788, %v1790
        %1792 = vrot.lane.b32.xlu0 %v1789, 124
        %v1793 = vpop.permute.xlu0 %1792
        %1794 = vrot.lane.b32.xlu0 %v1791, 124
        %v1795 = vpop.permute.xlu0 %1794
        %v1798 = vadd.f32 %v1754, %v1793
        %v1799 = vadd.f32 %v1755, %v1795
        %s1800 = sadd.s32 %s407, 95
        %s1801 = sld [smem:[#allocation3 + %s1800]]
        %v1802 = vstv %s1801
        %v1803 = vmul.f32 %v404, %v1802
        %v1804 = vmul.f32 %v405, %v1802
        %v1805 = vmul.f32 %v406, %v1802
        %v1809 = vrot.slane %v1803, 6
        %v1810 = vrot.slane %v1804, 6
        %v1811 = vsel %vm618, %v1809, %v1810
        %v1812 = vrot.slane %v1805, 6
        %v1813 = vsel %vm618, %v1810, %v1812
        %1814 = vrot.lane.b32.xlu0 %v1811, 124
        %v1815 = vpop.permute.xlu0 %1814
        %1816 = vrot.lane.b32.xlu0 %v1813, 124
        %v1817 = vpop.permute.xlu0 %1816
        %v1820 = vadd.f32 %v1776, %v1815
        %v1821 = vadd.f32 %v1777, %v1817
        %s1822 = sadd.s32 %s407, 5
        %s1823 = sld [smem:[#allocation3 + %s1822]]
        %v1824 = vstv %s1823
        %v1825 = vmul.f32 %v401, %v1824
        %v1826 = vmul.f32 %v402, %v1824
        %1829 = vrot.lane.b32.xlu0 %v1825, 123
        %v1830 = vpop.permute.xlu0 %1829
        %1831 = vrot.lane.b32.xlu0 %v1826, 123
        %v1832 = vpop.permute.xlu0 %1831
        %v1835 = vadd.f32 %v1798, %v1830
        %v1836 = vadd.f32 %v1799, %v1832
        %s1837 = sadd.s32 %s407, 54
        %s1838 = sld [smem:[#allocation3 + %s1837]]
        %v1839 = vstv %s1838
        %v1840 = vmul.f32 %v404, %v1839
        %v1841 = vmul.f32 %v405, %v1839
        %1844 = vrot.lane.b32.xlu0 %v1840, 123
        %v1845 = vpop.permute.xlu0 %1844
        %1846 = vrot.lane.b32.xlu0 %v1841, 123
        %v1847 = vpop.permute.xlu0 %1846
        %v1850 = vadd.f32 %v1820, %v1845
        %v1851 = vadd.f32 %v1821, %v1847
        %s1852 = sadd.s32 %s407, 12
        %s1853 = sld [smem:[#allocation3 + %s1852]]
        %v1854 = vstv %s1853
        %v1855 = vmul.f32 %v401, %v1854
        %v1856 = vmul.f32 %v402, %v1854
        %v1857 = vmul.f32 %v403, %v1854
        %v1861 = vrot.slane %v1855, 1
        %v1862 = vrot.slane %v1856, 1
        %v1863 = vsel %vm433, %v1861, %v1862
        %v1864 = vrot.slane %v1857, 1
        %v1865 = vsel %vm433, %v1862, %v1864
        %1866 = vrot.lane.b32.xlu0 %v1863, 123
        %v1867 = vpop.permute.xlu0 %1866
        %1868 = vrot.lane.b32.xlu0 %v1865, 123
        %v1869 = vpop.permute.xlu0 %1868
        %v1872 = vadd.f32 %v1835, %v1867
        %v1873 = vadd.f32 %v1836, %v1869
        %s1874 = sadd.s32 %s407, 61
        %s1875 = sld [smem:[#allocation3 + %s1874]]
        %v1876 = vstv %s1875
        %v1877 = vmul.f32 %v404, %v1876
        %v1878 = vmul.f32 %v405, %v1876
        %v1879 = vmul.f32 %v406, %v1876
        %v1883 = vrot.slane %v1877, 1
        %v1884 = vrot.slane %v1878, 1
        %v1885 = vsel %vm433, %v1883, %v1884
        %v1886 = vrot.slane %v1879, 1
        %v1887 = vsel %vm433, %v1884, %v1886
        %1888 = vrot.lane.b32.xlu0 %v1885, 123
        %v1889 = vpop.permute.xlu0 %1888
        %1890 = vrot.lane.b32.xlu0 %v1887, 123
        %v1891 = vpop.permute.xlu0 %1890
        %v1894 = vadd.f32 %v1850, %v1889
        %v1895 = vadd.f32 %v1851, %v1891
        %s1896 = sadd.s32 %s407, 19
        %s1897 = sld [smem:[#allocation3 + %s1896]]
        %v1898 = vstv %s1897
        %v1899 = vmul.f32 %v401, %v1898
        %v1900 = vmul.f32 %v402, %v1898
        %v1901 = vmul.f32 %v403, %v1898
        %v1905 = vrot.slane %v1899, 2
        %v1906 = vrot.slane %v1900, 2
        %v1907 = vsel %vm470, %v1905, %v1906
        %v1908 = vrot.slane %v1901, 2
        %v1909 = vsel %vm470, %v1906, %v1908
        %1910 = vrot.lane.b32.xlu0 %v1907, 123
        %v1911 = vpop.permute.xlu0 %1910
        %1912 = vrot.lane.b32.xlu0 %v1909, 123
        %v1913 = vpop.permute.xlu0 %1912
        %v1916 = vadd.f32 %v1872, %v1911
        %v1917 = vadd.f32 %v1873, %v1913
        %s1918 = sadd.s32 %s407, 68
        %s1919 = sld [smem:[#allocation3 + %s1918]]
        %v1920 = vstv %s1919
        %v1921 = vmul.f32 %v404, %v1920
        %v1922 = vmul.f32 %v405, %v1920
        %v1923 = vmul.f32 %v406, %v1920
        %v1927 = vrot.slane %v1921, 2
        %v1928 = vrot.slane %v1922, 2
        %v1929 = vsel %vm470, %v1927, %v1928
        %v1930 = vrot.slane %v1923, 2
        %v1931 = vsel %vm470, %v1928, %v1930
        %1932 = vrot.lane.b32.xlu0 %v1929, 123
        %v1933 = vpop.permute.xlu0 %1932
        %1934 = vrot.lane.b32.xlu0 %v1931, 123
        %v1935 = vpop.permute.xlu0 %1934
        %v1938 = vadd.f32 %v1894, %v1933
        %v1939 = vadd.f32 %v1895, %v1935
        %s1940 = sadd.s32 %s407, 26
        %s1941 = sld [smem:[#allocation3 + %s1940]]
        %v1942 = vstv %s1941
        %v1943 = vmul.f32 %v401, %v1942
        %v1944 = vmul.f32 %v402, %v1942
        %v1945 = vmul.f32 %v403, %v1942
        %v1949 = vrot.slane %v1943, 3
        %v1950 = vrot.slane %v1944, 3
        %v1951 = vsel %vm507, %v1949, %v1950
        %v1952 = vrot.slane %v1945, 3
        %v1953 = vsel %vm507, %v1950, %v1952
        %1954 = vrot.lane.b32.xlu0 %v1951, 123
        %v1955 = vpop.permute.xlu0 %1954
        %1956 = vrot.lane.b32.xlu0 %v1953, 123
        %v1957 = vpop.permute.xlu0 %1956
        %v1960 = vadd.f32 %v1916, %v1955
        %v1961 = vadd.f32 %v1917, %v1957
        %s1962 = sadd.s32 %s407, 75
        %s1963 = sld [smem:[#allocation3 + %s1962]]
        %v1964 = vstv %s1963
        %v1965 = vmul.f32 %v404, %v1964
        %v1966 = vmul.f32 %v405, %v1964
        %v1967 = vmul.f32 %v406, %v1964
        %v1971 = vrot.slane %v1965, 3
        %v1972 = vrot.slane %v1966, 3
        %v1973 = vsel %vm507, %v1971, %v1972
        %v1974 = vrot.slane %v1967, 3
        %v1975 = vsel %vm507, %v1972, %v1974
        %1976 = vrot.lane.b32.xlu0 %v1973, 123
        %v1977 = vpop.permute.xlu0 %1976
        %1978 = vrot.lane.b32.xlu0 %v1975, 123
        %v1979 = vpop.permute.xlu0 %1978
        %v1982 = vadd.f32 %v1938, %v1977
        %v1983 = vadd.f32 %v1939, %v1979
        %s1984 = sadd.s32 %s407, 33
        %s1985 = sld [smem:[#allocation3 + %s1984]]
        %v1986 = vstv %s1985
        %v1987 = vmul.f32 %v401, %v1986
        %v1988 = vmul.f32 %v402, %v1986
        %v1989 = vmul.f32 %v403, %v1986
        %v1993 = vrot.slane %v1987, 4
        %v1994 = vrot.slane %v1988, 4
        %v1995 = vsel %vm544, %v1993, %v1994
        %v1996 = vrot.slane %v1989, 4
        %v1997 = vsel %vm544, %v1994, %v1996
        %1998 = vrot.lane.b32.xlu0 %v1995, 123
        %v1999 = vpop.permute.xlu0 %1998
        %2000 = vrot.lane.b32.xlu0 %v1997, 123
        %v2001 = vpop.permute.xlu0 %2000
        %v2004 = vadd.f32 %v1960, %v1999
        %v2005 = vadd.f32 %v1961, %v2001
        %s2006 = sadd.s32 %s407, 82
        %s2007 = sld [smem:[#allocation3 + %s2006]]
        %v2008 = vstv %s2007
        %v2009 = vmul.f32 %v404, %v2008
        %v2010 = vmul.f32 %v405, %v2008
        %v2011 = vmul.f32 %v406, %v2008
        %v2015 = vrot.slane %v2009, 4
        %v2016 = vrot.slane %v2010, 4
        %v2017 = vsel %vm544, %v2015, %v2016
        %v2018 = vrot.slane %v2011, 4
        %v2019 = vsel %vm544, %v2016, %v2018
        %2020 = vrot.lane.b32.xlu0 %v2017, 123
        %v2021 = vpop.permute.xlu0 %2020
        %2022 = vrot.lane.b32.xlu0 %v2019, 123
        %v2023 = vpop.permute.xlu0 %2022
        %v2026 = vadd.f32 %v1982, %v2021
        %v2027 = vadd.f32 %v1983, %v2023
        %s2028 = sadd.s32 %s407, 40
        %s2029 = sld [smem:[#allocation3 + %s2028]]
        %v2030 = vstv %s2029
        %v2031 = vmul.f32 %v401, %v2030
        %v2032 = vmul.f32 %v402, %v2030
        %v2033 = vmul.f32 %v403, %v2030
        %v2037 = vrot.slane %v2031, 5
        %v2038 = vrot.slane %v2032, 5
        %v2039 = vsel %vm581, %v2037, %v2038
        %v2040 = vrot.slane %v2033, 5
        %v2041 = vsel %vm581, %v2038, %v2040
        %2042 = vrot.lane.b32.xlu0 %v2039, 123
        %v2043 = vpop.permute.xlu0 %2042
        %2044 = vrot.lane.b32.xlu0 %v2041, 123
        %v2045 = vpop.permute.xlu0 %2044
        %v2048 = vadd.f32 %v2004, %v2043
        %v2049 = vadd.f32 %v2005, %v2045
        %s2050 = sadd.s32 %s407, 89
        %s2051 = sld [smem:[#allocation3 + %s2050]]
        %v2052 = vstv %s2051
        %v2053 = vmul.f32 %v404, %v2052
        %v2054 = vmul.f32 %v405, %v2052
        %v2055 = vmul.f32 %v406, %v2052
        %v2059 = vrot.slane %v2053, 5
        %v2060 = vrot.slane %v2054, 5
        %v2061 = vsel %vm581, %v2059, %v2060
        %v2062 = vrot.slane %v2055, 5
        %v2063 = vsel %vm581, %v2060, %v2062
        %2064 = vrot.lane.b32.xlu0 %v2061, 123
        %v2065 = vpop.permute.xlu0 %2064
        %2066 = vrot.lane.b32.xlu0 %v2063, 123
        %v2067 = vpop.permute.xlu0 %2066
        %v2070 = vadd.f32 %v2026, %v2065
        %v2071 = vadd.f32 %v2027, %v2067
        %s2072 = sadd.s32 %s407, 47
        %s2073 = sld [smem:[#allocation3 + %s2072]]
        %v2074 = vstv %s2073
        %v2075 = vmul.f32 %v401, %v2074
        %v2076 = vmul.f32 %v402, %v2074
        %v2077 = vmul.f32 %v403, %v2074
        %v2081 = vrot.slane %v2075, 6
        %v2082 = vrot.slane %v2076, 6
        %v2083 = vsel %vm618, %v2081, %v2082
        %v2084 = vrot.slane %v2077, 6
        %v2085 = vsel %vm618, %v2082, %v2084
        %2086 = vrot.lane.b32.xlu0 %v2083, 123
        %v2087 = vpop.permute.xlu0 %2086
        %2088 = vrot.lane.b32.xlu0 %v2085, 123
        %v2089 = vpop.permute.xlu0 %2088
        %v2092 = vadd.f32 %v2048, %v2087
        %v2093 = vadd.f32 %v2049, %v2089
        %s2094 = sadd.s32 %s407, 96
        %s2095 = sld [smem:[#allocation3 + %s2094]]
        %v2096 = vstv %s2095
        %v2097 = vmul.f32 %v404, %v2096
        %v2098 = vmul.f32 %v405, %v2096
        %v2099 = vmul.f32 %v406, %v2096
        %v2103 = vrot.slane %v2097, 6
        %v2104 = vrot.slane %v2098, 6
        %v2105 = vsel %vm618, %v2103, %v2104
        %v2106 = vrot.slane %v2099, 6
        %v2107 = vsel %vm618, %v2104, %v2106
        %2108 = vrot.lane.b32.xlu0 %v2105, 123
        %v2109 = vpop.permute.xlu0 %2108
        %2110 = vrot.lane.b32.xlu0 %v2107, 123
        %v2111 = vpop.permute.xlu0 %2110
        %v2114 = vadd.f32 %v2070, %v2109
        %v2115 = vadd.f32 %v2071, %v2111
        %s2116 = sadd.s32 %s407, 6
        %s2117 = sld [smem:[#allocation3 + %s2116]]
        %v2118 = vstv %s2117
        %v2119 = vmul.f32 %v401, %v2118
        %v2120 = vmul.f32 %v402, %v2118
        %2123 = vrot.lane.b32.xlu0 %v2119, 122
        %v2124 = vpop.permute.xlu0 %2123
        %2125 = vrot.lane.b32.xlu0 %v2120, 122
        %v2126 = vpop.permute.xlu0 %2125
        %v2129 = vadd.f32 %v2092, %v2124
        %v2130 = vadd.f32 %v2093, %v2126
        %s2131 = sadd.s32 %s407, 55
        %s2132 = sld [smem:[#allocation3 + %s2131]]
        %v2133 = vstv %s2132
        %v2134 = vmul.f32 %v404, %v2133
        %v2135 = vmul.f32 %v405, %v2133
        %2138 = vrot.lane.b32.xlu0 %v2134, 122
        %v2139 = vpop.permute.xlu0 %2138
        %2140 = vrot.lane.b32.xlu0 %v2135, 122
        %v2141 = vpop.permute.xlu0 %2140
        %v2144 = vadd.f32 %v2114, %v2139
        %v2145 = vadd.f32 %v2115, %v2141
        %s2146 = sadd.s32 %s407, 13
        %s2147 = sld [smem:[#allocation3 + %s2146]]
        %v2148 = vstv %s2147
        %v2149 = vmul.f32 %v401, %v2148
        %v2150 = vmul.f32 %v402, %v2148
        %v2151 = vmul.f32 %v403, %v2148
        %v2155 = vrot.slane %v2149, 1
        %v2156 = vrot.slane %v2150, 1
        %v2157 = vsel %vm433, %v2155, %v2156
        %v2158 = vrot.slane %v2151, 1
        %v2159 = vsel %vm433, %v2156, %v2158
        %2160 = vrot.lane.b32.xlu0 %v2157, 122
        %v2161 = vpop.permute.xlu0 %2160
        %2162 = vrot.lane.b32.xlu0 %v2159, 122
        %v2163 = vpop.permute.xlu0 %2162
        %v2166 = vadd.f32 %v2129, %v2161
        %v2167 = vadd.f32 %v2130, %v2163
        %s2168 = sadd.s32 %s407, 62
        %s2169 = sld [smem:[#allocation3 + %s2168]]
        %v2170 = vstv %s2169
        %v2171 = vmul.f32 %v404, %v2170
        %v2172 = vmul.f32 %v405, %v2170
        %v2173 = vmul.f32 %v406, %v2170
        %v2177 = vrot.slane %v2171, 1
        %v2178 = vrot.slane %v2172, 1
        %v2179 = vsel %vm433, %v2177, %v2178
        %v2180 = vrot.slane %v2173, 1
        %v2181 = vsel %vm433, %v2178, %v2180
        %2182 = vrot.lane.b32.xlu0 %v2179, 122
        %v2183 = vpop.permute.xlu0 %2182
        %2184 = vrot.lane.b32.xlu0 %v2181, 122
        %v2185 = vpop.permute.xlu0 %2184
        %v2188 = vadd.f32 %v2144, %v2183
        %v2189 = vadd.f32 %v2145, %v2185
        %s2190 = sadd.s32 %s407, 20
        %s2191 = sld [smem:[#allocation3 + %s2190]]
        %v2192 = vstv %s2191
        %v2193 = vmul.f32 %v401, %v2192
        %v2194 = vmul.f32 %v402, %v2192
        %v2195 = vmul.f32 %v403, %v2192
        %v2199 = vrot.slane %v2193, 2
        %v2200 = vrot.slane %v2194, 2
        %v2201 = vsel %vm470, %v2199, %v2200
        %v2202 = vrot.slane %v2195, 2
        %v2203 = vsel %vm470, %v2200, %v2202
        %2204 = vrot.lane.b32.xlu0 %v2201, 122
        %v2205 = vpop.permute.xlu0 %2204
        %2206 = vrot.lane.b32.xlu0 %v2203, 122
        %v2207 = vpop.permute.xlu0 %2206
        %v2210 = vadd.f32 %v2166, %v2205
        %v2211 = vadd.f32 %v2167, %v2207
        %s2212 = sadd.s32 %s407, 69
        %s2213 = sld [smem:[#allocation3 + %s2212]]
        %v2214 = vstv %s2213
        %v2215 = vmul.f32 %v404, %v2214
        %v2216 = vmul.f32 %v405, %v2214
        %v2217 = vmul.f32 %v406, %v2214
        %v2221 = vrot.slane %v2215, 2
        %v2222 = vrot.slane %v2216, 2
        %v2223 = vsel %vm470, %v2221, %v2222
        %v2224 = vrot.slane %v2217, 2
        %v2225 = vsel %vm470, %v2222, %v2224
        %2226 = vrot.lane.b32.xlu0 %v2223, 122
        %v2227 = vpop.permute.xlu0 %2226
        %2228 = vrot.lane.b32.xlu0 %v2225, 122
        %v2229 = vpop.permute.xlu0 %2228
        %v2232 = vadd.f32 %v2188, %v2227
        %v2233 = vadd.f32 %v2189, %v2229
        %s2234 = sadd.s32 %s407, 27
        %s2235 = sld [smem:[#allocation3 + %s2234]]
        %v2236 = vstv %s2235
        %v2237 = vmul.f32 %v401, %v2236
        %v2238 = vmul.f32 %v402, %v2236
        %v2239 = vmul.f32 %v403, %v2236
        %v2243 = vrot.slane %v2237, 3
        %v2244 = vrot.slane %v2238, 3
        %v2245 = vsel %vm507, %v2243, %v2244
        %v2246 = vrot.slane %v2239, 3
        %v2247 = vsel %vm507, %v2244, %v2246
        %2248 = vrot.lane.b32.xlu0 %v2245, 122
        %v2249 = vpop.permute.xlu0 %2248
        %2250 = vrot.lane.b32.xlu0 %v2247, 122
        %v2251 = vpop.permute.xlu0 %2250
        %v2254 = vadd.f32 %v2210, %v2249
        %v2255 = vadd.f32 %v2211, %v2251
        %s2256 = sadd.s32 %s407, 76
        %s2257 = sld [smem:[#allocation3 + %s2256]]
        %v2258 = vstv %s2257
        %v2259 = vmul.f32 %v404, %v2258
        %v2260 = vmul.f32 %v405, %v2258
        %v2261 = vmul.f32 %v406, %v2258
        %v2265 = vrot.slane %v2259, 3
        %v2266 = vrot.slane %v2260, 3
        %v2267 = vsel %vm507, %v2265, %v2266
        %v2268 = vrot.slane %v2261, 3
        %v2269 = vsel %vm507, %v2266, %v2268
        %2270 = vrot.lane.b32.xlu0 %v2267, 122
        %v2271 = vpop.permute.xlu0 %2270
        %2272 = vrot.lane.b32.xlu0 %v2269, 122
        %v2273 = vpop.permute.xlu0 %2272
        %v2276 = vadd.f32 %v2232, %v2271
        %v2277 = vadd.f32 %v2233, %v2273
        %s2278 = sadd.s32 %s407, 34
        %s2279 = sld [smem:[#allocation3 + %s2278]]
        %v2280 = vstv %s2279
        %v2281 = vmul.f32 %v401, %v2280
        %v2282 = vmul.f32 %v402, %v2280
        %v2283 = vmul.f32 %v403, %v2280
        %v2287 = vrot.slane %v2281, 4
        %v2288 = vrot.slane %v2282, 4
        %v2289 = vsel %vm544, %v2287, %v2288
        %v2290 = vrot.slane %v2283, 4
        %v2291 = vsel %vm544, %v2288, %v2290
        %2292 = vrot.lane.b32.xlu0 %v2289, 122
        %v2293 = vpop.permute.xlu0 %2292
        %2294 = vrot.lane.b32.xlu0 %v2291, 122
        %v2295 = vpop.permute.xlu0 %2294
        %v2298 = vadd.f32 %v2254, %v2293
        %v2299 = vadd.f32 %v2255, %v2295
        %s2300 = sadd.s32 %s407, 83
        %s2301 = sld [smem:[#allocation3 + %s2300]]
        %v2302 = vstv %s2301
        %v2303 = vmul.f32 %v404, %v2302
        %v2304 = vmul.f32 %v405, %v2302
        %v2305 = vmul.f32 %v406, %v2302
        %v2309 = vrot.slane %v2303, 4
        %v2310 = vrot.slane %v2304, 4
        %v2311 = vsel %vm544, %v2309, %v2310
        %v2312 = vrot.slane %v2305, 4
        %v2313 = vsel %vm544, %v2310, %v2312
        %2314 = vrot.lane.b32.xlu0 %v2311, 122
        %v2315 = vpop.permute.xlu0 %2314
        %2316 = vrot.lane.b32.xlu0 %v2313, 122
        %v2317 = vpop.permute.xlu0 %2316
        %v2320 = vadd.f32 %v2276, %v2315
        %v2321 = vadd.f32 %v2277, %v2317
        %s2322 = sadd.s32 %s407, 41
        %s2323 = sld [smem:[#allocation3 + %s2322]]
        %v2324 = vstv %s2323
        %v2325 = vmul.f32 %v401, %v2324
        %v2326 = vmul.f32 %v402, %v2324
        %v2327 = vmul.f32 %v403, %v2324
        %v2331 = vrot.slane %v2325, 5
        %v2332 = vrot.slane %v2326, 5
        %v2333 = vsel %vm581, %v2331, %v2332
        %v2334 = vrot.slane %v2327, 5
        %v2335 = vsel %vm581, %v2332, %v2334
        %2336 = vrot.lane.b32.xlu0 %v2333, 122
        %v2337 = vpop.permute.xlu0 %2336
        %2338 = vrot.lane.b32.xlu0 %v2335, 122
        %v2339 = vpop.permute.xlu0 %2338
        %v2342 = vadd.f32 %v2298, %v2337
        %v2343 = vadd.f32 %v2299, %v2339
        %s2344 = sadd.s32 %s407, 90
        %s2345 = sld [smem:[#allocation3 + %s2344]]
        %v2346 = vstv %s2345
        %v2347 = vmul.f32 %v404, %v2346
        %v2348 = vmul.f32 %v405, %v2346
        %v2349 = vmul.f32 %v406, %v2346
        %v2353 = vrot.slane %v2347, 5
        %v2354 = vrot.slane %v2348, 5
        %v2355 = vsel %vm581, %v2353, %v2354
        %v2356 = vrot.slane %v2349, 5
        %v2357 = vsel %vm581, %v2354, %v2356
        %2358 = vrot.lane.b32.xlu0 %v2355, 122
        %v2359 = vpop.permute.xlu0 %2358
        %2360 = vrot.lane.b32.xlu0 %v2357, 122
        %v2361 = vpop.permute.xlu0 %2360
        %v2364 = vadd.f32 %v2320, %v2359
        %v2365 = vadd.f32 %v2321, %v2361
        %s2366 = sadd.s32 %s407, 48
        %s2367 = sld [smem:[#allocation3 + %s2366]]
        %v2368 = vstv %s2367
        %v2369 = vmul.f32 %v401, %v2368
        %v2370 = vmul.f32 %v402, %v2368
        %v2371 = vmul.f32 %v403, %v2368
        %v2375 = vrot.slane %v2369, 6
        %v2376 = vrot.slane %v2370, 6
        %v2377 = vsel %vm618, %v2375, %v2376
        %v2378 = vrot.slane %v2371, 6
        %v2379 = vsel %vm618, %v2376, %v2378
        %2380 = vrot.lane.b32.xlu0 %v2377, 122
        %v2381 = vpop.permute.xlu0 %2380
        %2382 = vrot.lane.b32.xlu0 %v2379, 122
        %v2383 = vpop.permute.xlu0 %2382
        %v2386 = vadd.f32 %v2342, %v2381
        %v2387 = vadd.f32 %v2343, %v2383
        %s2388 = sadd.s32 %s407, 97
        %s2389 = sld [smem:[#allocation3 + %s2388]]
        %v2390 = vstv %s2389
        %v2391 = vmul.f32 %v404, %v2390
        %v2392 = vmul.f32 %v405, %v2390
        %v2393 = vmul.f32 %v406, %v2390
        %v2397 = vrot.slane %v2391, 6
        %v2398 = vrot.slane %v2392, 6
        %v2399 = vsel %vm618, %v2397, %v2398
        %v2400 = vrot.slane %v2393, 6
        %v2401 = vsel %vm618, %v2398, %v2400
        %2402 = vrot.lane.b32.xlu0 %v2399, 122
        %v2403 = vpop.permute.xlu0 %2402
        %2404 = vrot.lane.b32.xlu0 %v2401, 122
        %v2405 = vpop.permute.xlu0 %2404
        %v2408 = vadd.f32 %v2364, %v2403
        %v2409 = vadd.f32 %v2365, %v2405
        %v2410 = vadd.f32 %v2386, %v2408
        %v2411 = vadd.f32 %v2387, %v2409
        %v2412 = vmax.f32 %v2410, -60.0
        %v2413 = vmax.f32 %v2411, -60.0
        %v2414 = vsub.f32 0.0, %v2412
        %v2415 = vsub.f32 0.0, %v2413
        %v2416 = vmul.f32 %v2414, 1.442695
        %v2417 = vpow.pop %v2416
        %v2418 = vmul.f32 %v2415, 1.442695
        %v2419 = vpow.pop %v2418
        %v2420 = vadd.f32 %v2417, 1.0
        %v2421 = vadd.f32 %v2419, 1.0
        %v2422 = vrcp.pop %v2420
        %v2423 = vrcp.pop %v2421
        %v2424 = vmul.f32 %v2420, %v2422
        %v2425 = vmul.f32 %v2421, %v2423
        %v2426 = vsub.f32 2.0, %v2424
        %v2427 = vsub.f32 2.0, %v2425
        %v2428 = vmul.f32 %v2422, %v2426
        %v2429 = vmul.f32 %v2423, %v2427
        %vm2430 = vcmask 130048
        %2431 = vst.msk [vmem:[%s345] sm:$0xff] %vm2430, %v2428
        %2432 = vst.msk [vmem:[%s345 + $0x8] sm:$0xff] %vm2430, %v2429
        %s2433 = sand.u32 %s184, 1
        %s2434 = scalar_lea.sflag [#allocation4], %s2433
        %s2435 = sand.u32 %s184, 1
        %s2436 = smul.addr %s2435, 16
        %s2437 = scalar_lea.vmem [#allocation6], %s2436
        // Predicated region
        $region45: #{pixel_attention_cga.1} parent=39 // pred_check
          %p2438 = pneg %p194
        $region46: #{pixel_attention_cga.1} parent=39 // pred_check_branch
          %2440 = sbr.rel (%p2438) target = $region48
        $region47: #{pixel_attention_cga.1} parent=39 // pred_region
          %s2442 = ssub.s32 256, 256
          %2443 = vsyncadd %s2434, %s2442
          %s2444 = smul.addr %s28, 2
          %s2445 = smul.addr %s27, 2
          %s2446 = sadd.s32 %s2444, %s2445
          %s2447 = smul.addr %s26, 8
          %s2448 = sadd.s32 %s2446, %s2447
          %s2449 = smul.addr %s2448, 128
          %s2450 = scalar_lea.hbm %s5, %s2449
          %s2451 = sshll.u32 %s2437, 4
          %s2452 = int_to_ptr.vmem [resolvable:$true] %s2451
          %2457 = dma.vmem_to_hbm [thread:$0]  %s2452, 256, %s2450, %s2434, 128, 128, 8
        $region48: #{pixel_attention_cga.1} parent=39 // pred_fallthru
          _
      $region40: #{pixel_attention_cga.1} parent=5 // pred_fallthru
        _
      %p2458 = scmp.le.s32.totalorder 2, %s16
      // Predicated region
      $region49: #{pixel_attention_cga.1} parent=5 // pred_check
        %p2459 = pneg %p2458
      $region50: #{pixel_attention_cga.1} parent=5 // pred_check_branch
        %2461 = sbr.rel (%p2459) target = $region52
      $region51: #{pixel_attention_cga.1} parent=5 // pred_region
        %s2462 = ssub.s32 %s16, 2
        // Predicated region
        $region53: #{pixel_attention_cga.1} parent=51 // pred_check
          %p2463 = pneg %p200
        $region54: #{pixel_attention_cga.1} parent=51 // pred_check_branch
          %2465 = sbr.rel (%p2463) target = $region56
        $region55: #{pixel_attention_cga.1} parent=51 // pred_region
          %s2466 = sand.u32 %s185, 1
          %s2467 = scalar_lea.sflag [#allocation4], %s2466
          %s2468 = sand.u32 %s185, 1
          %s2469 = smul.addr %s2468, 16
          %s2470 = scalar_lea.vmem [#allocation6], %s2469
          %2471 = dma.done %s2467, 256
        $region56: #{pixel_attention_cga.1} parent=51 // pred_fallthru
          _
      $region52: #{pixel_attention_cga.1} parent=5 // pred_fallthru
        _
    $region6: #{pixel_attention_cga.1} parent=1 // loop_footer
      %s20 = sadd.s32 1, %s16
    $region7: #{pixel_attention_cga.1} parent=1 // loop_footer_branch
      %15 = sbr.rel target = $region3
    $region8: #{pixel_attention_cga.1} parent=1 // loop_exit
      _
    %2472 = vsyncpa [#allocation4], 1
    %s2473 = scalar_lea.sflag [#allocation4], 1
    %2474 = vsyncpa %s2473, 1
    %2475 = vsyncpa [#allocation5], 1
    %s2476 = scalar_lea.sflag [#allocation5], 1
    %2477 = vsyncpa %s2476, 1

</llo_original>
